<compile_context>
chip_gen: v6e
topology: v6e:2x2x1
jax: 0.10.0
libtpu: 0.0.40
codegen_flags: <defaults>
</compile_context>

<pallas_src>
import functools
import math

import jax
import jax.numpy as jnp
from jax.experimental import pallas as pl
from jax.experimental.pallas import tpu as pltpu


def _round_up(a, m):
    return (a + m - 1) // m * m


# ----------------------------------------------------------------------------
# Pallas kernel: fused GEMM + (optional) ReLU, f32 accumulation in VMEM
# ----------------------------------------------------------------------------
def _gemm_act_kernel(x_ref, w_ref, o_ref, acc_ref, *, relu):
    @pl.when(pl.program_id(2) == 0)
    def _():
        acc_ref[...] = jnp.zeros_like(acc_ref)

    acc_ref[...] += jnp.dot(
        x_ref[...], w_ref[...], preferred_element_type=jnp.float32
    )

    @pl.when(pl.program_id(2) == pl.num_programs(2) - 1)
    def _():
        y = acc_ref[...]
        if relu:
            y = jnp.maximum(y, 0.0)
        o_ref[...] = y.astype(o_ref.dtype)


def gemm_act(x2d, wrec, relu, tm_max=256, tn_max=256, tk_max=1024):
    """y = act(x2d @ W).  x2d: (M, K) f32.  wrec: pre-padded bf16 weight record."""
    M, K = x2d.shape
    wp = wrec["w"]                      # (Kp, Np) bf16, padded to 128-multiples
    Kp, Np = wp.shape
    N = wrec["n"]
    assert K == wrec["k"]

    # --- adaptive M tile (sublane axis: multiple of 16 for bf16 packing) -----
    Mp = _round_up(M, 16)
    if Mp <= tm_max:
        tm = Mp
    else:
        tm = tm_max
        Mp = _round_up(M, tm)

    # --- adaptive N tile (lane axis: Np is already a multiple of 128) --------
    if Np <= tn_max:
        tn = Np
    else:
        tn = 256 if Np % 256 == 0 else 128

    # --- adaptive K tile: never over-pad K (fixes the old 512-pad waste) -----
    if Kp <= tk_max:
        tk = Kp                          # single k-step, no K padding beyond 128
    else:
        tk = 512
        Kp_new = _round_up(Kp, tk)
        if Kp_new != Kp:
            wp = jnp.pad(wp, ((0, Kp_new - Kp), (0, 0)))
            Kp = Kp_new

    xp = jnp.pad(x2d, ((0, Mp - M), (0, Kp - K))).astype(jnp.bfloat16)

    grid = (Mp // tm, Np // tn, Kp // tk)
    out = pl.pallas_call(
        functools.partial(_gemm_act_kernel, relu=relu),
        out_shape=jax.ShapeDtypeStruct((Mp, Np), jnp.float32),
        grid_spec=pltpu.PrefetchScalarGridSpec(
            num_scalar_prefetch=0,
            grid=grid,
            in_specs=[
                pl.BlockSpec((tm, tk), lambda i, j, k: (i, k)),
                pl.BlockSpec((tk, tn), lambda i, j, k: (k, j)),
            ],
            out_specs=pl.BlockSpec((tm, tn), lambda i, j, k: (i, j)),
            scratch_shapes=[pltpu.VMEM((tm, tn), jnp.float32)],
        ),
        compiler_params=pltpu.CompilerParams(
            dimension_semantics=("parallel", "parallel", "arbitrary"),
        ),
    )(xp, wp)
    return out[:M, :N]


# ----------------------------------------------------------------------------
# Conv wrapper: stride-aware im2col + fused GEMM (bias-free, matches nn.Conv2d)
# ----------------------------------------------------------------------------
def conv2d(x, wrec, ksize, stride, pad, relu):
    N, H, W, Cin = x.shape
    if pad > 0:
        x = jnp.pad(x, ((0, 0), (pad, pad), (pad, pad), (0, 0)))
    Hp, Wp = H + 2 * pad, W + 2 * pad
    Ho = (Hp - ksize) // stride + 1
    Wo = (Wp - ksize) // stride + 1
    cols = [
        x[:, kh:kh + (Ho - 1) * stride + 1:stride,
             kw:kw + (Wo - 1) * stride + 1:stride, :].reshape(N * Ho * Wo, Cin)
        for kh in range(ksize)
        for kw in range(ksize)
    ]
    xcol = cols[0] if len(cols) == 1 else jnp.concatenate(cols, axis=1)
    y = gemm_act(xcol, wrec, relu=relu)
    return y.reshape(N, Ho, Wo, -1)


# ----------------------------------------------------------------------------
# Deterministic parameter construction (synthetic, PyTorch-default-like init)
# ----------------------------------------------------------------------------
def _conv_weight(key, ksize, cin, cout):
    """Weight stored as (kh*kw*cin, cout) with rows in (kh, kw, cin) order,
    pre-padded to 128-multiples and cast to bf16 once at build time."""
    fan_in = ksize * ksize * cin
    bound = 1.0 / math.sqrt(fan_in)
    w = jax.random.uniform(key, (fan_in, cout), jnp.float32, -bound, bound)
    Kp, Np = _round_up(fan_in, 128), _round_up(cout, 128)
    wp = jnp.pad(w, ((0, Kp - fan_in), (0, Np - cout))).astype(jnp.bfloat16)
    return {"w": wp, "k": fan_in, "n": cout}


def build_params(in_channel=3, seed=0):
    k1, k2, k3 = jax.random.split(jax.random.PRNGKey(seed), 3)
    return {
        "conv1": _conv_weight(k1, 6, in_channel, 32),   # k=6, s=2, p=2
        "conv2": _conv_weight(k2, 4, 32, 64),           # k=4, s=2, p=2
        "conv3": _conv_weight(k3, 4, 64, 128),          # k=4, s=2, p=1
    }


# ----------------------------------------------------------------------------
# Forward pass (matches encoderUnet.forward: ReLU after each bias-free conv,
# Identity batch-norms, returns (x1, x2, x3))
# ----------------------------------------------------------------------------
def encoder_unet_forward(P, x_nchw):
    x = jnp.transpose(x_nchw, (0, 2, 3, 1))                          # NCHW->NHWC
    x1 = conv2d(x,  P["conv1"], ksize=6, stride=2, pad=2, relu=True)
    x2 = conv2d(x1, P["conv2"], ksize=4, stride=2, pad=2, relu=True)
    x3 = conv2d(x2, P["conv3"], ksize=4, stride=2, pad=1, relu=True)
    to_nchw = lambda t: jnp.transpose(t, (0, 3, 1, 2))               # NHWC->NCHW
    return to_nchw(x1), to_nchw(x2), to_nchw(x3)


if __name__ == "__main__":
    in_channel = 3
    B, H, W = 2, 32, 32

    x = jax.random.normal(jax.random.PRNGKey(0), (B, in_channel, H, W), jnp.float32)
    params = build_params(in_channel)

    # Close over params so the static k/n metadata stays Python ints under jit.
    fwd = jax.jit(functools.partial(encoder_unet_forward, params))
    x1, x2, x3 = jax.block_until_ready(fwd(x))

    assert x1.shape == (B, 32, 16, 16), x1.shape   # (32+4-6)//2+1 = 16
    assert x2.shape == (B, 64, 9, 9), x2.shape     # (16+4-4)//2+1 = 9
    assert x3.shape == (B, 128, 4, 4), x3.shape    # (9+2-4)//2+1  = 4
    assert bool(jnp.isfinite(x1).all() & jnp.isfinite(x2).all() & jnp.isfinite(x3).all())
    print("KERNEL_OK")
</pallas_src>

<mosaic_0001>
module attributes {stable_mosaic.version = 11 : i64} {
  func.func @_gemm_act_kernel(%arg0: i32, %arg1: i32, %arg2: i32, %arg3: memref<256x128xbf16, #tpu.memory_space<vmem>>, %arg4: memref<128x128xbf16, #tpu.memory_space<vmem>>, %arg5: memref<256x128xf32, #tpu.memory_space<vmem>>, %arg6: memref<256x128xf32, #tpu.memory_space<vmem>>) attributes {dimension_semantics = [#tpu.dimension_semantics<parallel>, #tpu.dimension_semantics<parallel>, #tpu.dimension_semantics<arbitrary>], iteration_bounds = array<i64: 2, 1, 1>, scalar_prefetch = 0 : i64, scratch_operands = 1 : i64, tpu.core_type = #tpu.core_type<tc>, window_params = [{transform_indices = @transform_0, window_bounds = array<i64: 256, 128>}, {transform_indices = @transform_1, window_bounds = array<i64: 128, 128>}, {transform_indices = @transform_2, window_bounds = array<i64: 256, 128>}]} {
    %c0_i32 = arith.constant 0 : i32
    %0 = arith.cmpi eq, %arg2, %c0_i32 : i32
    %1 = arith.extui %0 : i1 to i32
    %c0_i32_0 = arith.constant 0 : i32
    %2 = arith.cmpi ne, %1, %c0_i32_0 : i32
    scf.if %2 {
      %cst_10 = arith.constant 0.000000e+00 : f32
      %12 = vector.broadcast %cst_10 : f32 to vector<256x128xf32>
      %c0_11 = arith.constant 0 : index
      %c0_12 = arith.constant 0 : index
      %13 = vector.load %arg6[%c0_11, %c0_12] : memref<256x128xf32, #tpu.memory_space<vmem>>, vector<256x128xf32>
      tpu.vector_store %arg6[%c0_11, %c0_12], %12 {strides = array<i32>} : memref<256x128xf32, #tpu.memory_space<vmem>>, vector<256x128xf32>,
    } else {
    }
    %c0 = arith.constant 0 : index
    %c0_1 = arith.constant 0 : index
    %3 = vector.load %arg6[%c0, %c0_1] : memref<256x128xf32, #tpu.memory_space<vmem>>, vector<256x128xf32>
    %c0_2 = arith.constant 0 : index
    %c0_3 = arith.constant 0 : index
    %4 = vector.load %arg3[%c0_2, %c0_3] : memref<256x128xbf16, #tpu.memory_space<vmem>>, vector<256x128xbf16>
    %c0_4 = arith.constant 0 : index
    %c0_5 = arith.constant 0 : index
    %5 = vector.load %arg4[%c0_4, %c0_5] : memref<128x128xbf16, #tpu.memory_space<vmem>>, vector<128x128xbf16>
    %cst = arith.constant dense<0.000000e+00> : vector<256x128xf32>
    %6 = tpu.matmul %4, %5, %cst {dimension_numbers = #tpu.dot_dimension_numbers<[1], [0], [0], [1], [0, 0, 1, 1], [], []>} : vector<256x128xbf16>, vector<128x128xbf16>, vector<256x128xf32> -> vector<256x128xf32>
    %7 = arith.addf %3, %6 : vector<256x128xf32>
    %c0_6 = arith.constant 0 : index
    %c0_7 = arith.constant 0 : index
    %8 = vector.load %arg6[%c0_6, %c0_7] : memref<256x128xf32, #tpu.memory_space<vmem>>, vector<256x128xf32>
    tpu.vector_store %arg6[%c0_6, %c0_7], %7 {strides = array<i32>} : memref<256x128xf32, #tpu.memory_space<vmem>>, vector<256x128xf32>,
    %c0_i32_8 = arith.constant 0 : i32
    %9 = arith.cmpi eq, %arg2, %c0_i32_8 : i32
    %10 = arith.extui %9 : i1 to i32
    %c0_i32_9 = arith.constant 0 : i32
    %11 = arith.cmpi ne, %10, %c0_i32_9 : i32
    scf.if %11 {
      %c0_10 = arith.constant 0 : index
      %c0_11 = arith.constant 0 : index
      %12 = vector.load %arg6[%c0_10, %c0_11] : memref<256x128xf32, #tpu.memory_space<vmem>>, vector<256x128xf32>
      %cst_12 = arith.constant 0.000000e+00 : f32
      %13 = vector.broadcast %cst_12 : f32 to vector<256x128xf32>
      %14 = arith.maximumf %12, %13 : vector<256x128xf32>
      %c0_13 = arith.constant 0 : index
      %c0_14 = arith.constant 0 : index
      %15 = vector.load %arg5[%c0_13, %c0_14] : memref<256x128xf32, #tpu.memory_space<vmem>>, vector<256x128xf32>
      tpu.vector_store %arg5[%c0_13, %c0_14], %14 {strides = array<i32>} : memref<256x128xf32, #tpu.memory_space<vmem>>, vector<256x128xf32>,
    } else {
    }
    return
  }
  func.func @transform_0(%arg0: i32, %arg1: i32, %arg2: i32) -> (i32, i32) {
    %c0_i32 = arith.constant 0 : i32
    return %arg0, %arg2 : i32, i32
  }
  func.func @transform_1(%arg0: i32, %arg1: i32, %arg2: i32) -> (i32, i32) {
    %c0_i32 = arith.constant 0 : i32
    return %arg2, %arg1 : i32, i32
  }
  func.func @transform_2(%arg0: i32, %arg1: i32, %arg2: i32) -> (i32, i32) {
    %c0_i32 = arith.constant 0 : i32
    return %arg0, %arg1 : i32, i32
  }
}

module attributes {stable_mosaic.version = 11 : i64} {
  func.func @_gemm_act_kernel(%arg0: i32, %arg1: i32, %arg2: i32, %arg3: memref<176x512xbf16, #tpu.memory_space<vmem>>, %arg4: memref<512x128xbf16, #tpu.memory_space<vmem>>, %arg5: memref<176x128xf32, #tpu.memory_space<vmem>>, %arg6: memref<176x128xf32, #tpu.memory_space<vmem>>) attributes {dimension_semantics = [#tpu.dimension_semantics<parallel>, #tpu.dimension_semantics<parallel>, #tpu.dimension_semantics<arbitrary>], iteration_bounds = array<i64: 1, 1, 1>, scalar_prefetch = 0 : i64, scratch_operands = 1 : i64, tpu.core_type = #tpu.core_type<tc>, window_params = [{transform_indices = @transform_0, window_bounds = array<i64: 176, 512>}, {transform_indices = @transform_1, window_bounds = array<i64: 512, 128>}, {transform_indices = @transform_2, window_bounds = array<i64: 176, 128>}]} {
    %c0_i32 = arith.constant 0 : i32
    %0 = arith.cmpi eq, %arg2, %c0_i32 : i32
    %1 = arith.extui %0 : i1 to i32
    %c0_i32_0 = arith.constant 0 : i32
    %2 = arith.cmpi ne, %1, %c0_i32_0 : i32
    scf.if %2 {
      %cst_10 = arith.constant 0.000000e+00 : f32
      %12 = vector.broadcast %cst_10 : f32 to vector<176x128xf32>
      %c0_11 = arith.constant 0 : index
      %c0_12 = arith.constant 0 : index
      %13 = vector.load %arg6[%c0_11, %c0_12] : memref<176x128xf32, #tpu.memory_space<vmem>>, vector<176x128xf32>
      tpu.vector_store %arg6[%c0_11, %c0_12], %12 {strides = array<i32>} : memref<176x128xf32, #tpu.memory_space<vmem>>, vector<176x128xf32>,
    } else {
    }
    %c0 = arith.constant 0 : index
    %c0_1 = arith.constant 0 : index
    %3 = vector.load %arg6[%c0, %c0_1] : memref<176x128xf32, #tpu.memory_space<vmem>>, vector<176x128xf32>
    %c0_2 = arith.constant 0 : index
    %c0_3 = arith.constant 0 : index
    %4 = vector.load %arg3[%c0_2, %c0_3] : memref<176x512xbf16, #tpu.memory_space<vmem>>, vector<176x512xbf16>
    %c0_4 = arith.constant 0 : index
    %c0_5 = arith.constant 0 : index
    %5 = vector.load %arg4[%c0_4, %c0_5] : memref<512x128xbf16, #tpu.memory_space<vmem>>, vector<512x128xbf16>
    %cst = arith.constant dense<0.000000e+00> : vector<176x128xf32>
    %6 = tpu.matmul %4, %5, %cst {dimension_numbers = #tpu.dot_dimension_numbers<[1], [0], [0], [1], [0, 0, 1, 1], [], []>} : vector<176x512xbf16>, vector<512x128xbf16>, vector<176x128xf32> -> vector<176x128xf32>
    %7 = arith.addf %3, %6 : vector<176x128xf32>
    %c0_6 = arith.constant 0 : index
    %c0_7 = arith.constant 0 : index
    %8 = vector.load %arg6[%c0_6, %c0_7] : memref<176x128xf32, #tpu.memory_space<vmem>>, vector<176x128xf32>
    tpu.vector_store %arg6[%c0_6, %c0_7], %7 {strides = array<i32>} : memref<176x128xf32, #tpu.memory_space<vmem>>, vector<176x128xf32>,
    %c0_i32_8 = arith.constant 0 : i32
    %9 = arith.cmpi eq, %arg2, %c0_i32_8 : i32
    %10 = arith.extui %9 : i1 to i32
    %c0_i32_9 = arith.constant 0 : i32
    %11 = arith.cmpi ne, %10, %c0_i32_9 : i32
    scf.if %11 {
      %c0_10 = arith.constant 0 : index
      %c0_11 = arith.constant 0 : index
      %12 = vector.load %arg6[%c0_10, %c0_11] : memref<176x128xf32, #tpu.memory_space<vmem>>, vector<176x128xf32>
      %cst_12 = arith.constant 0.000000e+00 : f32
      %13 = vector.broadcast %cst_12 : f32 to vector<176x128xf32>
      %14 = arith.maximumf %12, %13 : vector<176x128xf32>
      %c0_13 = arith.constant 0 : index
      %c0_14 = arith.constant 0 : index
      %15 = vector.load %arg5[%c0_13, %c0_14] : memref<176x128xf32, #tpu.memory_space<vmem>>, vector<176x128xf32>
      tpu.vector_store %arg5[%c0_13, %c0_14], %14 {strides = array<i32>} : memref<176x128xf32, #tpu.memory_space<vmem>>, vector<176x128xf32>,
    } else {
    }
    return
  }
  func.func @transform_0(%arg0: i32, %arg1: i32, %arg2: i32) -> (i32, i32) {
    %c0_i32 = arith.constant 0 : i32
    return %arg0, %arg2 : i32, i32
  }
  func.func @transform_1(%arg0: i32, %arg1: i32, %arg2: i32) -> (i32, i32) {
    %c0_i32 = arith.constant 0 : i32
    return %arg2, %arg1 : i32, i32
  }
  func.func @transform_2(%arg0: i32, %arg1: i32, %arg2: i32) -> (i32, i32) {
    %c0_i32 = arith.constant 0 : i32
    return %arg0, %arg1 : i32, i32
  }
}

module attributes {stable_mosaic.version = 11 : i64} {
  func.func @_gemm_act_kernel(%arg0: i32, %arg1: i32, %arg2: i32, %arg3: memref<32x1024xbf16, #tpu.memory_space<vmem>>, %arg4: memref<1024x128xbf16, #tpu.memory_space<vmem>>, %arg5: memref<32x128xf32, #tpu.memory_space<vmem>>, %arg6: memref<32x128xf32, #tpu.memory_space<vmem>>) attributes {dimension_semantics = [#tpu.dimension_semantics<parallel>, #tpu.dimension_semantics<parallel>, #tpu.dimension_semantics<arbitrary>], iteration_bounds = array<i64: 1, 1, 1>, scalar_prefetch = 0 : i64, scratch_operands = 1 : i64, tpu.core_type = #tpu.core_type<tc>, window_params = [{transform_indices = @transform_0, window_bounds = array<i64: 32, 1024>}, {transform_indices = @transform_1, window_bounds = array<i64: 1024, 128>}, {transform_indices = @transform_2, window_bounds = array<i64: 32, 128>}]} {
    %c0_i32 = arith.constant 0 : i32
    %0 = arith.cmpi eq, %arg2, %c0_i32 : i32
    %1 = arith.extui %0 : i1 to i32
    %c0_i32_0 = arith.constant 0 : i32
    %2 = arith.cmpi ne, %1, %c0_i32_0 : i32
    scf.if %2 {
      %cst_10 = arith.constant 0.000000e+00 : f32
      %12 = vector.broadcast %cst_10 : f32 to vector<32x128xf32>
      %c0_11 = arith.constant 0 : index
      %c0_12 = arith.constant 0 : index
      %13 = vector.load %arg6[%c0_11, %c0_12] : memref<32x128xf32, #tpu.memory_space<vmem>>, vector<32x128xf32>
      tpu.vector_store %arg6[%c0_11, %c0_12], %12 {strides = array<i32>} : memref<32x128xf32, #tpu.memory_space<vmem>>, vector<32x128xf32>,
    } else {
    }
    %c0 = arith.constant 0 : index
    %c0_1 = arith.constant 0 : index
    %3 = vector.load %arg6[%c0, %c0_1] : memref<32x128xf32, #tpu.memory_space<vmem>>, vector<32x128xf32>
    %c0_2 = arith.constant 0 : index
    %c0_3 = arith.constant 0 : index
    %4 = vector.load %arg3[%c0_2, %c0_3] : memref<32x1024xbf16, #tpu.memory_space<vmem>>, vector<32x1024xbf16>
    %c0_4 = arith.constant 0 : index
    %c0_5 = arith.constant 0 : index
    %5 = vector.load %arg4[%c0_4, %c0_5] : memref<1024x128xbf16, #tpu.memory_space<vmem>>, vector<1024x128xbf16>
    %cst = arith.constant dense<0.000000e+00> : vector<32x128xf32>
    %6 = tpu.matmul %4, %5, %cst {dimension_numbers = #tpu.dot_dimension_numbers<[1], [0], [0], [1], [0, 0, 1, 1], [], []>} : vector<32x1024xbf16>, vector<1024x128xbf16>, vector<32x128xf32> -> vector<32x128xf32>
    %7 = arith.addf %3, %6 : vector<32x128xf32>
    %c0_6 = arith.constant 0 : index
    %c0_7 = arith.constant 0 : index
    %8 = vector.load %arg6[%c0_6, %c0_7] : memref<32x128xf32, #tpu.memory_space<vmem>>, vector<32x128xf32>
    tpu.vector_store %arg6[%c0_6, %c0_7], %7 {strides = array<i32>} : memref<32x128xf32, #tpu.memory_space<vmem>>, vector<32x128xf32>,
    %c0_i32_8 = arith.constant 0 : i32
    %9 = arith.cmpi eq, %arg2, %c0_i32_8 : i32
    %10 = arith.extui %9 : i1 to i32
    %c0_i32_9 = arith.constant 0 : i32
    %11 = arith.cmpi ne, %10, %c0_i32_9 : i32
    scf.if %11 {
      %c0_10 = arith.constant 0 : index
      %c0_11 = arith.constant 0 : index
      %12 = vector.load %arg6[%c0_10, %c0_11] : memref<32x128xf32, #tpu.memory_space<vmem>>, vector<32x128xf32>
      %cst_12 = arith.constant 0.000000e+00 : f32
      %13 = vector.broadcast %cst_12 : f32 to vector<32x128xf32>
      %14 = arith.maximumf %12, %13 : vector<32x128xf32>
      %c0_13 = arith.constant 0 : index
      %c0_14 = arith.constant 0 : index
      %15 = vector.load %arg5[%c0_13, %c0_14] : memref<32x128xf32, #tpu.memory_space<vmem>>, vector<32x128xf32>
      tpu.vector_store %arg5[%c0_13, %c0_14], %14 {strides = array<i32>} : memref<32x128xf32, #tpu.memory_space<vmem>>, vector<32x128xf32>,
    } else {
    }
    return
  }
  func.func @transform_0(%arg0: i32, %arg1: i32, %arg2: i32) -> (i32, i32) {
    %c0_i32 = arith.constant 0 : i32
    return %arg0, %arg2 : i32, i32
  }
  func.func @transform_1(%arg0: i32, %arg1: i32, %arg2: i32) -> (i32, i32) {
    %c0_i32 = arith.constant 0 : i32
    return %arg2, %arg1 : i32, i32
  }
  func.func @transform_2(%arg0: i32, %arg1: i32, %arg2: i32) -> (i32, i32) {
    %c0_i32 = arith.constant 0 : i32
    return %arg0, %arg1 : i32, i32
  }
}

</mosaic_0001>

<llo_original>
// kernel: encoder_unet_forward.3
$region0: #{encoder_unet_forward.3}
  #allocation0 [shape = 'u32[]', space=smem, size = 0x4, offset = 0x4, fixed_abs, tag = 'smem constant byte address 0x4 - core index']
  #allocation1 [shape = 'u32[144,128]{1,0:T(1,128)}', space=vmem, size = 0x12000, scoped, tag = 'internal scratch']
  #allocation2 [shape = 'f32[256,128]{1,0:T(8,128)}', space=vmem, size = 0x20000, scoped, tag = 'scratch operand']
  %s0 = inlined_call_operand.vmem [shape: bf16[512,128], index: 0, kind: input, shape index: {}]
  %s1 = inlined_call_operand.vmem [shape: bf16[128,128], index: 1, kind: input, shape index: {}]
  %s2 = inlined_call_operand.vmem [shape: f32[512,128], index: 2, kind: output, shape index: {}]
  %s3 = sld [smem:[#allocation0]]
  $region49: #{encoder_unet_forward.3} parent=0
    _
  %s5 = ssub.s32 1, %s3
  %s6 = scalar_select 0, %s5, %s3
  loop: start=0, step=1, limit=4
  $region2: #{encoder_unet_forward.3} parent=0 // loop_pre_header
    _
  $region3: #{encoder_unet_forward.3} parent=0 // loop_header
    %s8 = sphi 0, %s12
    %p9 = scmp.ge.s32.totalorder %s8, 4
    %s15 = sphi 0, %s34
    %s16 = sphi 0, %s30
    %s17 = sphi 0, %s26
    %s18 = sphi 0, %s15
    %s19 = sphi 0, %s16
    %s20 = sphi 0, %s17
    %s21 = sphi 0, %s18
    %s22 = sphi 0, %s19
    %s23 = sphi 0, %s20
    %s39 = sphi 0, %s41
    %s42 = sphi 0, %s39
    %s43 = sphi 0, %s42
    %s59 = sphi 0, %s43
    %s67 = sphi 0, %s69
    %s70 = sphi 0, %s67
    %s71 = sphi 0, %s70
    %s87 = sphi 0, %s71
    %s95 = sphi 0, %s97
    %s98 = sphi 0, %s95
    %s99 = sphi 0, %s98
    %s115 = sphi 0, %s99
  $region4: #{encoder_unet_forward.3} parent=0 // loop_header_branch
    %11 = sbr.rel (%p9) target = $region8
  $region5: #{encoder_unet_forward.3} parent=0 // loop_body
    %s13 = ssub.s32 %s8, 1
    %s14 = ssub.s32 %s8, 2
    %s24 = sadd.s32 1, %s17
    %p25 = scmp.ge.s32.totalorder %s24, 1
    %s26 = scalar_select %p25, 0, %s24
    %s27 = sadd.s32 1, %s16
    %s28 = scalar_select %p25, %s27, %s16
    %p29 = scmp.ge.s32.totalorder %s28, 1
    %s30 = scalar_select %p29, 0, %s28
    %s31 = sadd.s32 1, %s15
    %s32 = scalar_select %p29, %s31, %s15
    %p33 = scmp.ge.s32.totalorder %s32, 2
    %s34 = scalar_select %p33, 0, %s32
    %s35 = ssub.s32 %s15, %s34
    %s36 = ssub.s32 %s17, %s26
    %s37 = sor.u32 %s35, %s36
    %p38 = scmp.eq.s32.totalorder %s37, 0
    %s40 = sadd.s32 %s39, 1
    %s41 = scalar_select %p38, %s39, %s40
    %p44 = pneg %p38
    %p45 = scmp.eq.s32.totalorder %s8, 1
    %p46 = por %p44, %p45
    %p47 = scmp.ne.s32.totalorder %s39, %s42
    %p48 = scmp.eq.s32.totalorder %s8, 0
    %p49 = por %p47, %p48
    %p50 = scmp.ne.s32.totalorder %s39, %s42
    %p51 = scmp.eq.s32.totalorder %s13, 1
    %p52 = por %p50, %p51
    %p53 = scmp.ne.s32.totalorder %s42, %s43
    %p54 = scmp.eq.s32.totalorder %s13, 0
    %p55 = por %p53, %p54
    %p56 = scmp.ne.s32.totalorder %s42, %s43
    %p57 = scmp.eq.s32.totalorder %s14, 1
    %p58 = por %p56, %p57
    %p60 = scmp.ne.s32.totalorder %s43, %s59
    %p61 = scmp.eq.s32.totalorder %s14, 0
    %p62 = por %p60, %p61
    %s63 = ssub.s32 %s17, %s26
    %s64 = ssub.s32 %s16, %s30
    %s65 = sor.u32 %s63, %s64
    %p66 = scmp.eq.s32.totalorder %s65, 0
    %s68 = sadd.s32 %s67, 1
    %s69 = scalar_select %p66, %s67, %s68
    %p72 = pneg %p66
    %p73 = scmp.eq.s32.totalorder %s8, 1
    %p74 = por %p72, %p73
    %p75 = scmp.ne.s32.totalorder %s67, %s70
    %p76 = scmp.eq.s32.totalorder %s8, 0
    %p77 = por %p75, %p76
    %p78 = scmp.ne.s32.totalorder %s67, %s70
    %p79 = scmp.eq.s32.totalorder %s13, 1
    %p80 = por %p78, %p79
    %p81 = scmp.ne.s32.totalorder %s70, %s71
    %p82 = scmp.eq.s32.totalorder %s13, 0
    %p83 = por %p81, %p82
    %p84 = scmp.ne.s32.totalorder %s70, %s71
    %p85 = scmp.eq.s32.totalorder %s14, 1
    %p86 = por %p84, %p85
    %p88 = scmp.ne.s32.totalorder %s71, %s87
    %p89 = scmp.eq.s32.totalorder %s14, 0
    %p90 = por %p88, %p89
    %s91 = ssub.s32 %s15, %s34
    %s92 = ssub.s32 %s16, %s30
    %s93 = sor.u32 %s91, %s92
    %p94 = scmp.eq.s32.totalorder %s93, 0
    %s96 = sadd.s32 %s95, 1
    %s97 = scalar_select %p94, %s95, %s96
    %p100 = pneg %p94
    %p101 = scmp.eq.s32.totalorder %s8, 1
    %p102 = por %p100, %p101
    %p103 = scmp.ne.s32.totalorder %s95, %s98
    %p104 = scmp.eq.s32.totalorder %s8, 0
    %p105 = por %p103, %p104
    %p106 = scmp.ne.s32.totalorder %s95, %s98
    %p107 = scmp.eq.s32.totalorder %s13, 1
    %p108 = por %p106, %p107
    %p109 = scmp.ne.s32.totalorder %s98, %s99
    %p110 = scmp.eq.s32.totalorder %s13, 0
    %p111 = por %p109, %p110
    %p112 = scmp.ne.s32.totalorder %s98, %s99
    %p113 = scmp.eq.s32.totalorder %s14, 1
    %p114 = por %p112, %p113
    %p116 = scmp.ne.s32.totalorder %s99, %s115
    %p117 = scmp.eq.s32.totalorder %s14, 0
    %p118 = por %p116, %p117
    %p119 = scmp.le.s32.totalorder 1, %s8
    %p120 = scmp.lt.s32.totalorder %s8, 3
    %p121 = pnand %p119, %p120
    %p122 = pneg %p121
    // Predicated region
    $region9: #{encoder_unet_forward.3} parent=5 // pred_check
      _
    $region10: #{encoder_unet_forward.3} parent=5 // pred_check_branch
      %124 = sbr.rel (%p121) target = $region12
    $region11: #{encoder_unet_forward.3} parent=5 // pred_region
      %s125 = ssub.s32 %s8, 1
      // Predicated region
      $region13: #{encoder_unet_forward.3} parent=11 // pred_check
        %p126 = pneg %p83
      $region14: #{encoder_unet_forward.3} parent=11 // pred_check_branch
        %128 = sbr.rel (%p126) target = $region16
      $region15: #{encoder_unet_forward.3} parent=11 // pred_region
        %s129 = smul.u32 16, %s20
        %p130 = scmp.lt.s32.totalorder %s129, 15
        %s131 = scalar_select %p130, %s129, 15
        %p132 = scmp.lt.s32.totalorder %s19, 0
        %s133 = scalar_select %p132, %s19, 0
        %s134 = sadd.s32 %s133, %s131
        %s135 = smul.addr %s134, 4
        %s136 = scalar_lea.vmem %s1, %s135
        %s137 = smul.u32 16, %s20
      $region16: #{encoder_unet_forward.3} parent=11 // pred_fallthru
        _
    $region12: #{encoder_unet_forward.3} parent=5 // pred_fallthru
      _
    %p138 = scmp.lt.s32.totalorder %s8, 2
    // Predicated region
    $region17: #{encoder_unet_forward.3} parent=5 // pred_check
      %p139 = pneg %p138
    $region18: #{encoder_unet_forward.3} parent=5 // pred_check_branch
      %141 = sbr.rel (%p139) target = $region20
    $region19: #{encoder_unet_forward.3} parent=5 // pred_region
      // Predicated region
      $region21: #{encoder_unet_forward.3} parent=19 // pred_check
        %p142 = pneg %p49
      $region22: #{encoder_unet_forward.3} parent=19 // pred_check_branch
        %144 = sbr.rel (%p142) target = $region24
      $region23: #{encoder_unet_forward.3} parent=19 // pred_region
        %s145 = smul.u32 32, %s15
        %p146 = scmp.lt.s32.totalorder %s145, 63
        %s147 = scalar_select %p146, %s145, 63
        %p148 = scmp.lt.s32.totalorder %s17, 0
        %s149 = scalar_select %p148, %s17, 0
        %s150 = sadd.s32 %s149, %s147
        %s151 = smul.addr %s150, 4
        %s152 = scalar_lea.vmem %s0, %s151
        %s153 = smul.u32 32, %s15
      $region24: #{encoder_unet_forward.3} parent=19 // pred_fallthru
        _
    $region20: #{encoder_unet_forward.3} parent=5 // pred_fallthru
      _
    %p154 = scmp.le.s32.totalorder 1, %s8
    %p155 = scmp.lt.s32.totalorder %s8, 3
    %p156 = pnand %p154, %p155
    %p157 = pneg %p156
    // Predicated region
    $region25: #{encoder_unet_forward.3} parent=5 // pred_check
      _
    $region26: #{encoder_unet_forward.3} parent=5 // pred_check_branch
      %159 = sbr.rel (%p156) target = $region28
    $region27: #{encoder_unet_forward.3} parent=5 // pred_region
      %s160 = ssub.s32 %s8, 1
      %s161 = smul.u32 32, %s18
      %p162 = scmp.lt.s32.totalorder %s161, 63
      %s163 = scalar_select %p162, %s161, 63
      %p164 = scmp.lt.s32.totalorder %s20, 0
      %s165 = scalar_select %p164, %s20, 0
      %s166 = sadd.s32 %s165, %s163
      %s167 = smul.addr %s166, 4
      %s168 = scalar_lea.vmem %s0, %s167
      %p169 = pneg %p55
      %p170 = pneg %p52
      %s171 = smul.u32 16, %s20
      %p172 = scmp.lt.s32.totalorder %s171, 15
      %s173 = scalar_select %p172, %s171, 15
      %p174 = scmp.lt.s32.totalorder %s19, 0
      %s175 = scalar_select %p174, %s19, 0
      %s176 = sadd.s32 %s175, %s173
      %s177 = smul.addr %s176, 4
      %s178 = scalar_lea.vmem %s1, %s177
      %p179 = pneg %p83
      %p180 = pneg %p80
      %p181 = pneg %p111
      %p182 = pneg %p108
      %s183 = smul.u32 32, %s18
      %p184 = scmp.lt.s32.totalorder %s183, 63
      %s185 = scalar_select %p184, %s183, 63
      %p186 = scmp.lt.s32.totalorder %s19, 0
      %s187 = scalar_select %p186, %s19, 0
      %s188 = sadd.s32 %s187, %s185
      %s189 = smul.addr %s188, 8
      %s190 = scalar_lea.vmem %s2, %s189
      %s191 = smul.u32 32, %s18
      %p192 = scmp.lt.s32.totalorder %s191, 63
      %s193 = scalar_select %p192, %s191, 63
      %p194 = scmp.lt.s32.totalorder %s20, 0
      %s195 = scalar_select %p194, %s20, 0
      %s196 = sadd.s32 %s195, %s193
      %s197 = smul.addr %s196, 4
      %s198 = scalar_lea.vmem %s0, %s197
      %s199 = smul.u32 32, %s18
      %s200 = smul.u32 16, %s20
      %p201 = scmp.lt.s32.totalorder %s200, 15
      %s202 = scalar_select %p201, %s200, 15
      %p203 = scmp.lt.s32.totalorder %s19, 0
      %s204 = scalar_select %p203, %s19, 0
      %s205 = sadd.s32 %s204, %s202
      %s206 = smul.addr %s205, 4
      %s207 = scalar_lea.vmem %s1, %s206
      %s208 = smul.u32 16, %s20
      %s209 = smul.u32 32, %s18
      %p210 = scmp.lt.s32.totalorder %s209, 63
      %s211 = scalar_select %p210, %s209, 63
      %p212 = scmp.lt.s32.totalorder %s19, 0
      %s213 = scalar_select %p212, %s19, 0
      %s214 = sadd.s32 %s213, %s211
      %s215 = smul.addr %s214, 8
      %s216 = scalar_lea.vmem %s2, %s215
      %s217 = smul.u32 32, %s18
      %p219 = scmp.eq.s32.totalorder %s20, 0
      // Predicated region
      $region29: #{encoder_unet_forward.3} parent=27 // pred_check
        %p220 = pneg %p219
      $region30: #{encoder_unet_forward.3} parent=27 // pred_check_branch
        %222 = sbr.rel (%p220) target = $region32
      $region31: #{encoder_unet_forward.3} parent=27 // pred_region
        %223 = vst [vmem:[#allocation2] sm:$0xff] 0.0
        %224 = vst [vmem:[#allocation2 + $0x8] sm:$0xff] 0.0
        %225 = vst [vmem:[#allocation2 + $0x10] sm:$0xff] 0.0
        %226 = vst [vmem:[#allocation2 + $0x18] sm:$0xff] 0.0
        %227 = vst [vmem:[#allocation2 + $0x20] sm:$0xff] 0.0
        %228 = vst [vmem:[#allocation2 + $0x28] sm:$0xff] 0.0
        %229 = vst [vmem:[#allocation2 + $0x30] sm:$0xff] 0.0
        %230 = vst [vmem:[#allocation2 + $0x38] sm:$0xff] 0.0
        %231 = vst [vmem:[#allocation2 + $0x40] sm:$0xff] 0.0
        %232 = vst [vmem:[#allocation2 + $0x48] sm:$0xff] 0.0
        %233 = vst [vmem:[#allocation2 + $0x50] sm:$0xff] 0.0
        %234 = vst [vmem:[#allocation2 + $0x58] sm:$0xff] 0.0
        %235 = vst [vmem:[#allocation2 + $0x60] sm:$0xff] 0.0
        %236 = vst [vmem:[#allocation2 + $0x68] sm:$0xff] 0.0
        %237 = vst [vmem:[#allocation2 + $0x70] sm:$0xff] 0.0
        %238 = vst [vmem:[#allocation2 + $0x78] sm:$0xff] 0.0
        %239 = vst [vmem:[#allocation2 + $0x80] sm:$0xff] 0.0
        %240 = vst [vmem:[#allocation2 + $0x88] sm:$0xff] 0.0
        %241 = vst [vmem:[#allocation2 + $0x90] sm:$0xff] 0.0
        %242 = vst [vmem:[#allocation2 + $0x98] sm:$0xff] 0.0
        %243 = vst [vmem:[#allocation2 + $0xa0] sm:$0xff] 0.0
        %244 = vst [vmem:[#allocation2 + $0xa8] sm:$0xff] 0.0
        %245 = vst [vmem:[#allocation2 + $0xb0] sm:$0xff] 0.0
        %246 = vst [vmem:[#allocation2 + $0xb8] sm:$0xff] 0.0
        %247 = vst [vmem:[#allocation2 + $0xc0] sm:$0xff] 0.0
        %248 = vst [vmem:[#allocation2 + $0xc8] sm:$0xff] 0.0
        %249 = vst [vmem:[#allocation2 + $0xd0] sm:$0xff] 0.0
        %250 = vst [vmem:[#allocation2 + $0xd8] sm:$0xff] 0.0
        %251 = vst [vmem:[#allocation2 + $0xe0] sm:$0xff] 0.0
        %252 = vst [vmem:[#allocation2 + $0xe8] sm:$0xff] 0.0
        %253 = vst [vmem:[#allocation2 + $0xf0] sm:$0xff] 0.0
        %254 = vst [vmem:[#allocation2 + $0xf8] sm:$0xff] 0.0
      $region32: #{encoder_unet_forward.3} parent=27 // pred_fallthru
        _
      %v255 = vld [vmem:[#allocation2] sm:$0xff]
      %v256 = vld [vmem:[#allocation2 + $0x8] sm:$0xff]
      %v257 = vld [vmem:[#allocation2 + $0x10] sm:$0xff]
      %v258 = vld [vmem:[#allocation2 + $0x18] sm:$0xff]
      %v259 = vld [vmem:[#allocation2 + $0x20] sm:$0xff]
      %v260 = vld [vmem:[#allocation2 + $0x28] sm:$0xff]
      %v261 = vld [vmem:[#allocation2 + $0x30] sm:$0xff]
      %v262 = vld [vmem:[#allocation2 + $0x38] sm:$0xff]
      %v263 = vld [vmem:[#allocation2 + $0x40] sm:$0xff]
      %v264 = vld [vmem:[#allocation2 + $0x48] sm:$0xff]
      %v265 = vld [vmem:[#allocation2 + $0x50] sm:$0xff]
      %v266 = vld [vmem:[#allocation2 + $0x58] sm:$0xff]
      %v267 = vld [vmem:[#allocation2 + $0x60] sm:$0xff]
      %v268 = vld [vmem:[#allocation2 + $0x68] sm:$0xff]
      %v269 = vld [vmem:[#allocation2 + $0x70] sm:$0xff]
      %v270 = vld [vmem:[#allocation2 + $0x78] sm:$0xff]
      %v271 = vld [vmem:[#allocation2 + $0x80] sm:$0xff]
      %v272 = vld [vmem:[#allocation2 + $0x88] sm:$0xff]
      %v273 = vld [vmem:[#allocation2 + $0x90] sm:$0xff]
      %v274 = vld [vmem:[#allocation2 + $0x98] sm:$0xff]
      %v275 = vld [vmem:[#allocation2 + $0xa0] sm:$0xff]
      %v276 = vld [vmem:[#allocation2 + $0xa8] sm:$0xff]
      %v277 = vld [vmem:[#allocation2 + $0xb0] sm:$0xff]
      %v278 = vld [vmem:[#allocation2 + $0xb8] sm:$0xff]
      %v279 = vld [vmem:[#allocation2 + $0xc0] sm:$0xff]
      %v280 = vld [vmem:[#allocation2 + $0xc8] sm:$0xff]
      %v281 = vld [vmem:[#allocation2 + $0xd0] sm:$0xff]
      %v282 = vld [vmem:[#allocation2 + $0xd8] sm:$0xff]
      %v283 = vld [vmem:[#allocation2 + $0xe0] sm:$0xff]
      %v284 = vld [vmem:[#allocation2 + $0xe8] sm:$0xff]
      %v285 = vld [vmem:[#allocation2 + $0xf0] sm:$0xff]
      %v286 = vld [vmem:[#allocation2 + $0xf8] sm:$0xff]
      %v287 = vld [vmem:[%s198] sm:$0xf]
      %v288 = vld [vmem:[%s198 + $0x4] sm:$0xf]
      %v289 = vld [vmem:[%s198 + $0x8] sm:$0xf]
      %v290 = vld [vmem:[%s198 + $0xc] sm:$0xf]
      %v291 = vld [vmem:[%s198 + $0x10] sm:$0xf]
      %v292 = vld [vmem:[%s198 + $0x14] sm:$0xf]
      %v293 = vld [vmem:[%s198 + $0x18] sm:$0xf]
      %v294 = vld [vmem:[%s198 + $0x1c] sm:$0xf]
      %v295 = vld [vmem:[%s198 + $0x20] sm:$0xf]
      %v296 = vld [vmem:[%s198 + $0x24] sm:$0xf]
      %v297 = vld [vmem:[%s198 + $0x28] sm:$0xf]
      %v298 = vld [vmem:[%s198 + $0x2c] sm:$0xf]
      %v299 = vld [vmem:[%s198 + $0x30] sm:$0xf]
      %v300 = vld [vmem:[%s198 + $0x34] sm:$0xf]
      %v301 = vld [vmem:[%s198 + $0x38] sm:$0xf]
      %v302 = vld [vmem:[%s198 + $0x3c] sm:$0xf]
      %v303 = vld [vmem:[%s198 + $0x40] sm:$0xf]
      %v304 = vld [vmem:[%s198 + $0x44] sm:$0xf]
      %v305 = vld [vmem:[%s198 + $0x48] sm:$0xf]
      %v306 = vld [vmem:[%s198 + $0x4c] sm:$0xf]
      %v307 = vld [vmem:[%s198 + $0x50] sm:$0xf]
      %v308 = vld [vmem:[%s198 + $0x54] sm:$0xf]
      %v309 = vld [vmem:[%s198 + $0x58] sm:$0xf]
      %v310 = vld [vmem:[%s198 + $0x5c] sm:$0xf]
      %v311 = vld [vmem:[%s198 + $0x60] sm:$0xf]
      %v312 = vld [vmem:[%s198 + $0x64] sm:$0xf]
      %v313 = vld [vmem:[%s198 + $0x68] sm:$0xf]
      %v314 = vld [vmem:[%s198 + $0x6c] sm:$0xf]
      %v315 = vld [vmem:[%s198 + $0x70] sm:$0xf]
      %v316 = vld [vmem:[%s198 + $0x74] sm:$0xf]
      %v317 = vld [vmem:[%s198 + $0x78] sm:$0xf]
      %v318 = vld [vmem:[%s198 + $0x7c] sm:$0xf]
      %v319 = vld [vmem:[%s207] sm:$0xf]
      %v320 = vld [vmem:[%s207 + $0x4] sm:$0xf]
      %v321 = vld [vmem:[%s207 + $0x8] sm:$0xf]
      %v322 = vld [vmem:[%s207 + $0xc] sm:$0xf]
      %v323 = vld [vmem:[%s207 + $0x10] sm:$0xf]
      %v324 = vld [vmem:[%s207 + $0x14] sm:$0xf]
      %v325 = vld [vmem:[%s207 + $0x18] sm:$0xf]
      %v326 = vld [vmem:[%s207 + $0x1c] sm:$0xf]
      %v327 = vld [vmem:[%s207 + $0x20] sm:$0xf]
      %v328 = vld [vmem:[%s207 + $0x24] sm:$0xf]
      %v329 = vld [vmem:[%s207 + $0x28] sm:$0xf]
      %v330 = vld [vmem:[%s207 + $0x2c] sm:$0xf]
      %v331 = vld [vmem:[%s207 + $0x30] sm:$0xf]
      %v332 = vld [vmem:[%s207 + $0x34] sm:$0xf]
      %v333 = vld [vmem:[%s207 + $0x38] sm:$0xf]
      %v334 = vld [vmem:[%s207 + $0x3c] sm:$0xf]
      %v367 = vunpack.c.l.b16 %v287
      %v368 = vunpack.c.l.b16 %v288
      %v369 = vunpack.c.l.b16 %v289
      %v370 = vunpack.c.l.b16 %v290
      %v371 = vunpack.c.l.b16 %v291
      %v372 = vunpack.c.l.b16 %v292
      %v373 = vunpack.c.l.b16 %v293
      %v374 = vunpack.c.l.b16 %v294
      %v375 = vunpack.c.l.b16 %v295
      %v376 = vunpack.c.l.b16 %v296
      %v377 = vunpack.c.l.b16 %v297
      %v378 = vunpack.c.l.b16 %v298
      %v379 = vunpack.c.l.b16 %v299
      %v380 = vunpack.c.l.b16 %v300
      %v381 = vunpack.c.l.b16 %v301
      %v382 = vunpack.c.l.b16 %v302
      %v383 = vunpack.c.l.b16 %v303
      %v384 = vunpack.c.l.b16 %v304
      %v385 = vunpack.c.l.b16 %v305
      %v386 = vunpack.c.l.b16 %v306
      %v387 = vunpack.c.l.b16 %v307
      %v388 = vunpack.c.l.b16 %v308
      %v389 = vunpack.c.l.b16 %v309
      %v390 = vunpack.c.l.b16 %v310
      %v391 = vunpack.c.l.b16 %v311
      %v392 = vunpack.c.l.b16 %v312
      %v393 = vunpack.c.l.b16 %v313
      %v394 = vunpack.c.l.b16 %v314
      %v395 = vunpack.c.l.b16 %v315
      %v396 = vunpack.c.l.b16 %v316
      %v397 = vunpack.c.l.b16 %v317
      %v398 = vunpack.c.l.b16 %v318
      %v399 = vpack.c.b16 %v368, %v367
      %v400 = vpack.c.b16 %v370, %v369
      %v401 = vpack.c.b16 %v372, %v371
      %v402 = vpack.c.b16 %v374, %v373
      %v403 = vpack.c.b16 %v376, %v375
      %v404 = vpack.c.b16 %v378, %v377
      %v405 = vpack.c.b16 %v380, %v379
      %v406 = vpack.c.b16 %v382, %v381
      %v407 = vpack.c.b16 %v384, %v383
      %v408 = vpack.c.b16 %v386, %v385
      %v409 = vpack.c.b16 %v388, %v387
      %v410 = vpack.c.b16 %v390, %v389
      %v411 = vpack.c.b16 %v392, %v391
      %v412 = vpack.c.b16 %v394, %v393
      %v413 = vpack.c.b16 %v396, %v395
      %v414 = vpack.c.b16 %v398, %v397
      %v447 = vunpack.c.l.b16 %v319
      %v448 = vunpack.c.l.b16 %v320
      %v449 = vunpack.c.l.b16 %v321
      %v450 = vunpack.c.l.b16 %v322
      %v451 = vunpack.c.l.b16 %v323
      %v452 = vunpack.c.l.b16 %v324
      %v453 = vunpack.c.l.b16 %v325
      %v454 = vunpack.c.l.b16 %v326
      %v455 = vunpack.c.l.b16 %v327
      %v456 = vunpack.c.l.b16 %v328
      %v457 = vunpack.c.l.b16 %v329
      %v458 = vunpack.c.l.b16 %v330
      %v459 = vunpack.c.l.b16 %v331
      %v460 = vunpack.c.l.b16 %v332
      %v461 = vunpack.c.l.b16 %v333
      %v462 = vunpack.c.l.b16 %v334
      %v463 = vpack.c.b16 %v448, %v447
      %v464 = vpack.c.b16 %v450, %v449
      %v465 = vpack.c.b16 %v452, %v451
      %v466 = vpack.c.b16 %v454, %v453
      %v467 = vpack.c.b16 %v456, %v455
      %v468 = vpack.c.b16 %v458, %v457
      %v469 = vpack.c.b16 %v460, %v459
      %v470 = vpack.c.b16 %v462, %v461
      %479 = vmatprep.subr.bf16.mxu0 0
      %480 = vmatpush1.bf16.msra.mxu0 %v470
      %481 = vmatprep.subr.bf16.mxu0 0
      %482 = vmatpush1.bf16.msra.mxu0 %v469
      %483 = vmatprep.subr.bf16.mxu0 0
      %484 = vmatpush1.bf16.msra.mxu0 %v468
      %485 = vmatprep.subr.bf16.mxu0 0
      %486 = vmatpush1.bf16.msra.mxu0 %v467
      %487 = vmatprep.subr.bf16.mxu0 0
      %488 = vmatpush1.bf16.msra.mxu0 %v466
      %489 = vmatprep.subr.bf16.mxu0 0
      %490 = vmatpush1.bf16.msra.mxu0 %v465
      %491 = vmatprep.subr.bf16.mxu0 0
      %492 = vmatpush1.bf16.msra.mxu0 %v464
      %493 = vmatprep.subr.bf16.mxu0 0
      %494 = vmatpush1.bf16.msra.mxu0 %v463
      %495 = vmatprep.subr.bf16.mxu0 0
      %496 = vmatpush2.bf16.msra.mxu0 0
      %497 = vmatprep.subr.bf16.mxu0 0
      %498 = vmatpush2.bf16.msra.mxu0 0
      %499 = vmatprep.subr.bf16.mxu0 0
      %500 = vmatpush2.bf16.msra.mxu0 0
      %501 = vmatprep.subr.bf16.mxu0 0
      %502 = vmatpush2.bf16.msra.mxu0 0
      %503 = vmatprep.subr.bf16.mxu0 0
      %504 = vmatpush2.bf16.msra.mxu0 0
      %505 = vmatprep.subr.bf16.mxu0 0
      %506 = vmatpush2.bf16.msra.mxu0 0
      %507 = vmatprep.subr.bf16.mxu0 0
      %508 = vmatpush2.bf16.msra.mxu0 0
      %509 = vmatprep.subr.bf16.mxu0 0
      %510 = vmatpush2.bf16.msra.mxu0 0
      %511 = vmatprep.mubr.bf16.mxu0 0
      %512 = vmatmul.mubr.bf16.gmra.mxu0 %v399
      %v513 = vpop.f32.mrf.mxu0
      %v514 = vadd.f32 0.0, %v513
      %v515 = vpop.f32.mrf.mxu0
      %v516 = vpop.f32.mrf.mxu0
      %v517 = vadd.f32 0.0, %v516
      %v518 = vpop.f32.mrf.mxu0
      %519 = vmatprep.mubr.bf16.mxu0 0
      %520 = vmatmul.mubr.bf16.gmra.mxu0 %v400
      %v521 = vpop.f32.mrf.mxu0
      %v522 = vadd.f32 0.0, %v521
      %v523 = vpop.f32.mrf.mxu0
      %v524 = vpop.f32.mrf.mxu0
      %v525 = vadd.f32 0.0, %v524
      %v526 = vpop.f32.mrf.mxu0
      %527 = vmatprep.mubr.bf16.mxu0 0
      %528 = vmatmul.mubr.bf16.gmra.mxu0 %v401
      %v529 = vpop.f32.mrf.mxu0
      %v530 = vadd.f32 0.0, %v529
      %v531 = vpop.f32.mrf.mxu0
      %v532 = vpop.f32.mrf.mxu0
      %v533 = vadd.f32 0.0, %v532
      %v534 = vpop.f32.mrf.mxu0
      %535 = vmatprep.mubr.bf16.mxu0 0
      %536 = vmatmul.mubr.bf16.gmra.mxu0 %v402
      %v537 = vpop.f32.mrf.mxu0
      %v538 = vadd.f32 0.0, %v537
      %v539 = vpop.f32.mrf.mxu0
      %v540 = vpop.f32.mrf.mxu0
      %v541 = vadd.f32 0.0, %v540
      %v542 = vpop.f32.mrf.mxu0
      %543 = vmatprep.mubr.bf16.mxu0 0
      %544 = vmatmul.mubr.bf16.gmra.mxu0 %v403
      %v545 = vpop.f32.mrf.mxu0
      %v546 = vadd.f32 0.0, %v545
      %v547 = vpop.f32.mrf.mxu0
      %v548 = vpop.f32.mrf.mxu0
      %v549 = vadd.f32 0.0, %v548
      %v550 = vpop.f32.mrf.mxu0
      %551 = vmatprep.mubr.bf16.mxu0 0
      %552 = vmatmul.mubr.bf16.gmra.mxu0 %v404
      %v553 = vpop.f32.mrf.mxu0
      %v554 = vadd.f32 0.0, %v553
      %v555 = vpop.f32.mrf.mxu0
      %v556 = vpop.f32.mrf.mxu0
      %v557 = vadd.f32 0.0, %v556
      %v558 = vpop.f32.mrf.mxu0
      %559 = vmatprep.mubr.bf16.mxu0 0
      %560 = vmatmul.mubr.bf16.gmra.mxu0 %v405
      %v561 = vpop.f32.mrf.mxu0
      %v562 = vadd.f32 0.0, %v561
      %v563 = vpop.f32.mrf.mxu0
      %v564 = vpop.f32.mrf.mxu0
      %v565 = vadd.f32 0.0, %v564
      %v566 = vpop.f32.mrf.mxu0
      %567 = vmatprep.mubr.bf16.mxu0 0
      %568 = vmatmul.mubr.bf16.gmra.mxu0 %v406
      %v569 = vpop.f32.mrf.mxu0
      %v570 = vadd.f32 0.0, %v569
      %v571 = vpop.f32.mrf.mxu0
      %v572 = vpop.f32.mrf.mxu0
      %v573 = vadd.f32 0.0, %v572
      %v574 = vpop.f32.mrf.mxu0
      %575 = vmatprep.mubr.bf16.mxu0 0
      %576 = vmatmul.mubr.bf16.gmra.mxu0 %v407
      %v577 = vpop.f32.mrf.mxu0
      %v578 = vadd.f32 0.0, %v577
      %v579 = vpop.f32.mrf.mxu0
      %v580 = vpop.f32.mrf.mxu0
      %v581 = vadd.f32 0.0, %v580
      %v582 = vpop.f32.mrf.mxu0
      %583 = vmatprep.mubr.bf16.mxu0 0
      %584 = vmatmul.mubr.bf16.gmra.mxu0 %v408
      %v585 = vpop.f32.mrf.mxu0
      %v586 = vadd.f32 0.0, %v585
      %v587 = vpop.f32.mrf.mxu0
      %v588 = vpop.f32.mrf.mxu0
      %v589 = vadd.f32 0.0, %v588
      %v590 = vpop.f32.mrf.mxu0
      %591 = vmatprep.mubr.bf16.mxu0 0
      %592 = vmatmul.mubr.bf16.gmra.mxu0 %v409
      %v593 = vpop.f32.mrf.mxu0
      %v594 = vadd.f32 0.0, %v593
      %v595 = vpop.f32.mrf.mxu0
      %v596 = vpop.f32.mrf.mxu0
      %v597 = vadd.f32 0.0, %v596
      %v598 = vpop.f32.mrf.mxu0
      %599 = vmatprep.mubr.bf16.mxu0 0
      %600 = vmatmul.mubr.bf16.gmra.mxu0 %v410
      %v601 = vpop.f32.mrf.mxu0
      %v602 = vadd.f32 0.0, %v601
      %v603 = vpop.f32.mrf.mxu0
      %v604 = vpop.f32.mrf.mxu0
      %v605 = vadd.f32 0.0, %v604
      %v606 = vpop.f32.mrf.mxu0
      %607 = vmatprep.mubr.bf16.mxu0 0
      %608 = vmatmul.mubr.bf16.gmra.mxu0 %v411
      %v609 = vpop.f32.mrf.mxu0
      %v610 = vadd.f32 0.0, %v609
      %v611 = vpop.f32.mrf.mxu0
      %v612 = vpop.f32.mrf.mxu0
      %v613 = vadd.f32 0.0, %v612
      %v614 = vpop.f32.mrf.mxu0
      %615 = vmatprep.mubr.bf16.mxu0 0
      %616 = vmatmul.mubr.bf16.gmra.mxu0 %v412
      %v617 = vpop.f32.mrf.mxu0
      %v618 = vadd.f32 0.0, %v617
      %v619 = vpop.f32.mrf.mxu0
      %v620 = vpop.f32.mrf.mxu0
      %v621 = vadd.f32 0.0, %v620
      %v622 = vpop.f32.mrf.mxu0
      %623 = vmatprep.mubr.bf16.mxu0 0
      %624 = vmatmul.mubr.bf16.gmra.mxu0 %v413
      %v625 = vpop.f32.mrf.mxu0
      %v626 = vadd.f32 0.0, %v625
      %v627 = vpop.f32.mrf.mxu0
      %v628 = vpop.f32.mrf.mxu0
      %v629 = vadd.f32 0.0, %v628
      %v630 = vpop.f32.mrf.mxu0
      %631 = vmatprep.mubr.bf16.mxu0 0
      %632 = vmatmul.mubr.bf16.gmra.mxu0 %v414
      %v633 = vpop.f32.mrf.mxu0
      %v634 = vadd.f32 0.0, %v633
      %v635 = vpop.f32.mrf.mxu0
      %v636 = vpop.f32.mrf.mxu0
      %v637 = vadd.f32 0.0, %v636
      %v638 = vpop.f32.mrf.mxu0
      %639 = vdwg.mxu0
      %v640 = vadd.f32 %v255, %v514
      %v641 = vadd.f32 %v256, %v517
      %v642 = vadd.f32 %v257, %v522
      %v643 = vadd.f32 %v258, %v525
      %v644 = vadd.f32 %v259, %v530
      %v645 = vadd.f32 %v260, %v533
      %v646 = vadd.f32 %v261, %v538
      %v647 = vadd.f32 %v262, %v541
      %v648 = vadd.f32 %v263, %v546
      %v649 = vadd.f32 %v264, %v549
      %v650 = vadd.f32 %v265, %v554
      %v651 = vadd.f32 %v266, %v557
      %v652 = vadd.f32 %v267, %v562
      %v653 = vadd.f32 %v268, %v565
      %v654 = vadd.f32 %v269, %v570
      %v655 = vadd.f32 %v270, %v573
      %v656 = vadd.f32 %v271, %v578
      %v657 = vadd.f32 %v272, %v581
      %v658 = vadd.f32 %v273, %v586
      %v659 = vadd.f32 %v274, %v589
      %v660 = vadd.f32 %v275, %v594
      %v661 = vadd.f32 %v276, %v597
      %v662 = vadd.f32 %v277, %v602
      %v663 = vadd.f32 %v278, %v605
      %v664 = vadd.f32 %v279, %v610
      %v665 = vadd.f32 %v280, %v613
      %v666 = vadd.f32 %v281, %v618
      %v667 = vadd.f32 %v282, %v621
      %v668 = vadd.f32 %v283, %v626
      %v669 = vadd.f32 %v284, %v629
      %v670 = vadd.f32 %v285, %v634
      %v671 = vadd.f32 %v286, %v637
      %672 = vst [vmem:[#allocation2] sm:$0xff] %v640
      %673 = vst [vmem:[#allocation2 + $0x8] sm:$0xff] %v641
      %674 = vst [vmem:[#allocation2 + $0x10] sm:$0xff] %v642
      %675 = vst [vmem:[#allocation2 + $0x18] sm:$0xff] %v643
      %676 = vst [vmem:[#allocation2 + $0x20] sm:$0xff] %v644
      %677 = vst [vmem:[#allocation2 + $0x28] sm:$0xff] %v645
      %678 = vst [vmem:[#allocation2 + $0x30] sm:$0xff] %v646
      %679 = vst [vmem:[#allocation2 + $0x38] sm:$0xff] %v647
      %680 = vst [vmem:[#allocation2 + $0x40] sm:$0xff] %v648
      %681 = vst [vmem:[#allocation2 + $0x48] sm:$0xff] %v649
      %682 = vst [vmem:[#allocation2 + $0x50] sm:$0xff] %v650
      %683 = vst [vmem:[#allocation2 + $0x58] sm:$0xff] %v651
      %684 = vst [vmem:[#allocation2 + $0x60] sm:$0xff] %v652
      %685 = vst [vmem:[#allocation2 + $0x68] sm:$0xff] %v653
      %686 = vst [vmem:[#allocation2 + $0x70] sm:$0xff] %v654
      %687 = vst [vmem:[#allocation2 + $0x78] sm:$0xff] %v655
      %688 = vst [vmem:[#allocation2 + $0x80] sm:$0xff] %v656
      %689 = vst [vmem:[#allocation2 + $0x88] sm:$0xff] %v657
      %690 = vst [vmem:[#allocation2 + $0x90] sm:$0xff] %v658
      %691 = vst [vmem:[#allocation2 + $0x98] sm:$0xff] %v659
      %692 = vst [vmem:[#allocation2 + $0xa0] sm:$0xff] %v660
      %693 = vst [vmem:[#allocation2 + $0xa8] sm:$0xff] %v661
      %694 = vst [vmem:[#allocation2 + $0xb0] sm:$0xff] %v662
      %695 = vst [vmem:[#allocation2 + $0xb8] sm:$0xff] %v663
      %696 = vst [vmem:[#allocation2 + $0xc0] sm:$0xff] %v664
      %697 = vst [vmem:[#allocation2 + $0xc8] sm:$0xff] %v665
      %698 = vst [vmem:[#allocation2 + $0xd0] sm:$0xff] %v666
      %699 = vst [vmem:[#allocation2 + $0xd8] sm:$0xff] %v667
      %700 = vst [vmem:[#allocation2 + $0xe0] sm:$0xff] %v668
      %701 = vst [vmem:[#allocation2 + $0xe8] sm:$0xff] %v669
      %702 = vst [vmem:[#allocation2 + $0xf0] sm:$0xff] %v670
      %703 = vst [vmem:[#allocation2 + $0xf8] sm:$0xff] %v671
      // Predicated region
      $region33: #{encoder_unet_forward.3} parent=27 // pred_check
        %p704 = pneg %p219
      $region34: #{encoder_unet_forward.3} parent=27 // pred_check_branch
        %706 = sbr.rel (%p704) target = $region36
      $region35: #{encoder_unet_forward.3} parent=27 // pred_region
        %v707 = vld [vmem:[#allocation2] sm:$0xff]
        %v708 = vld [vmem:[#allocation2 + $0x8] sm:$0xff]
        %v709 = vld [vmem:[#allocation2 + $0x10] sm:$0xff]
        %v710 = vld [vmem:[#allocation2 + $0x18] sm:$0xff]
        %v711 = vld [vmem:[#allocation2 + $0x20] sm:$0xff]
        %v712 = vld [vmem:[#allocation2 + $0x28] sm:$0xff]
        %v713 = vld [vmem:[#allocation2 + $0x30] sm:$0xff]
        %v714 = vld [vmem:[#allocation2 + $0x38] sm:$0xff]
        %v715 = vld [vmem:[#allocation2 + $0x40] sm:$0xff]
        %v716 = vld [vmem:[#allocation2 + $0x48] sm:$0xff]
        %v717 = vld [vmem:[#allocation2 + $0x50] sm:$0xff]
        %v718 = vld [vmem:[#allocation2 + $0x58] sm:$0xff]
        %v719 = vld [vmem:[#allocation2 + $0x60] sm:$0xff]
        %v720 = vld [vmem:[#allocation2 + $0x68] sm:$0xff]
        %v721 = vld [vmem:[#allocation2 + $0x70] sm:$0xff]
        %v722 = vld [vmem:[#allocation2 + $0x78] sm:$0xff]
        %v723 = vld [vmem:[#allocation2 + $0x80] sm:$0xff]
        %v724 = vld [vmem:[#allocation2 + $0x88] sm:$0xff]
        %v725 = vld [vmem:[#allocation2 + $0x90] sm:$0xff]
        %v726 = vld [vmem:[#allocation2 + $0x98] sm:$0xff]
        %v727 = vld [vmem:[#allocation2 + $0xa0] sm:$0xff]
        %v728 = vld [vmem:[#allocation2 + $0xa8] sm:$0xff]
        %v729 = vld [vmem:[#allocation2 + $0xb0] sm:$0xff]
        %v730 = vld [vmem:[#allocation2 + $0xb8] sm:$0xff]
        %v731 = vld [vmem:[#allocation2 + $0xc0] sm:$0xff]
        %v732 = vld [vmem:[#allocation2 + $0xc8] sm:$0xff]
        %v733 = vld [vmem:[#allocation2 + $0xd0] sm:$0xff]
        %v734 = vld [vmem:[#allocation2 + $0xd8] sm:$0xff]
        %v735 = vld [vmem:[#allocation2 + $0xe0] sm:$0xff]
        %v736 = vld [vmem:[#allocation2 + $0xe8] sm:$0xff]
        %v737 = vld [vmem:[#allocation2 + $0xf0] sm:$0xff]
        %v738 = vld [vmem:[#allocation2 + $0xf8] sm:$0xff]
        %v739 = vmax.f32 %v707, 0.0
        %v740 = vmax.f32 %v708, 0.0
        %v741 = vmax.f32 %v709, 0.0
        %v742 = vmax.f32 %v710, 0.0
        %v743 = vmax.f32 %v711, 0.0
        %v744 = vmax.f32 %v712, 0.0
        %v745 = vmax.f32 %v713, 0.0
        %v746 = vmax.f32 %v714, 0.0
        %v747 = vmax.f32 %v715, 0.0
        %v748 = vmax.f32 %v716, 0.0
        %v749 = vmax.f32 %v717, 0.0
        %v750 = vmax.f32 %v718, 0.0
        %v751 = vmax.f32 %v719, 0.0
        %v752 = vmax.f32 %v720, 0.0
        %v753 = vmax.f32 %v721, 0.0
        %v754 = vmax.f32 %v722, 0.0
        %v755 = vmax.f32 %v723, 0.0
        %v756 = vmax.f32 %v724, 0.0
        %v757 = vmax.f32 %v725, 0.0
        %v758 = vmax.f32 %v726, 0.0
        %v759 = vmax.f32 %v727, 0.0
        %v760 = vmax.f32 %v728, 0.0
        %v761 = vmax.f32 %v729, 0.0
        %v762 = vmax.f32 %v730, 0.0
        %v763 = vmax.f32 %v731, 0.0
        %v764 = vmax.f32 %v732, 0.0
        %v765 = vmax.f32 %v733, 0.0
        %v766 = vmax.f32 %v734, 0.0
        %v767 = vmax.f32 %v735, 0.0
        %v768 = vmax.f32 %v736, 0.0
        %v769 = vmax.f32 %v737, 0.0
        %v770 = vmax.f32 %v738, 0.0
        %771 = vst [vmem:[%s216] sm:$0xff] %v739
        %772 = vst [vmem:[%s216 + $0x8] sm:$0xff] %v740
        %773 = vst [vmem:[%s216 + $0x10] sm:$0xff] %v741
        %774 = vst [vmem:[%s216 + $0x18] sm:$0xff] %v742
        %775 = vst [vmem:[%s216 + $0x20] sm:$0xff] %v743
        %776 = vst [vmem:[%s216 + $0x28] sm:$0xff] %v744
        %777 = vst [vmem:[%s216 + $0x30] sm:$0xff] %v745
        %778 = vst [vmem:[%s216 + $0x38] sm:$0xff] %v746
        %779 = vst [vmem:[%s216 + $0x40] sm:$0xff] %v747
        %780 = vst [vmem:[%s216 + $0x48] sm:$0xff] %v748
        %781 = vst [vmem:[%s216 + $0x50] sm:$0xff] %v749
        %782 = vst [vmem:[%s216 + $0x58] sm:$0xff] %v750
        %783 = vst [vmem:[%s216 + $0x60] sm:$0xff] %v751
        %784 = vst [vmem:[%s216 + $0x68] sm:$0xff] %v752
        %785 = vst [vmem:[%s216 + $0x70] sm:$0xff] %v753
        %786 = vst [vmem:[%s216 + $0x78] sm:$0xff] %v754
        %787 = vst [vmem:[%s216 + $0x80] sm:$0xff] %v755
        %788 = vst [vmem:[%s216 + $0x88] sm:$0xff] %v756
        %789 = vst [vmem:[%s216 + $0x90] sm:$0xff] %v757
        %790 = vst [vmem:[%s216 + $0x98] sm:$0xff] %v758
        %791 = vst [vmem:[%s216 + $0xa0] sm:$0xff] %v759
        %792 = vst [vmem:[%s216 + $0xa8] sm:$0xff] %v760
        %793 = vst [vmem:[%s216 + $0xb0] sm:$0xff] %v761
        %794 = vst [vmem:[%s216 + $0xb8] sm:$0xff] %v762
        %795 = vst [vmem:[%s216 + $0xc0] sm:$0xff] %v763
        %796 = vst [vmem:[%s216 + $0xc8] sm:$0xff] %v764
        %797 = vst [vmem:[%s216 + $0xd0] sm:$0xff] %v765
        %798 = vst [vmem:[%s216 + $0xd8] sm:$0xff] %v766
        %799 = vst [vmem:[%s216 + $0xe0] sm:$0xff] %v767
        %800 = vst [vmem:[%s216 + $0xe8] sm:$0xff] %v768
        %801 = vst [vmem:[%s216 + $0xf0] sm:$0xff] %v769
        %802 = vst [vmem:[%s216 + $0xf8] sm:$0xff] %v770
      $region36: #{encoder_unet_forward.3} parent=27 // pred_fallthru
        _
      %s803 = smul.u32 32, %s18
      %p804 = scmp.lt.s32.totalorder %s803, 63
      %s805 = scalar_select %p804, %s803, 63
      %p806 = scmp.lt.s32.totalorder %s19, 0
      %s807 = scalar_select %p806, %s19, 0
      %s808 = sadd.s32 %s807, %s805
      %s809 = smul.addr %s808, 8
      %s810 = scalar_lea.vmem %s2, %s809
      // Predicated region
      $region37: #{encoder_unet_forward.3} parent=27 // pred_check
        %p811 = pneg %p108
      $region38: #{encoder_unet_forward.3} parent=27 // pred_check_branch
        %813 = sbr.rel (%p811) target = $region40
      $region39: #{encoder_unet_forward.3} parent=27 // pred_region
        %s814 = smul.u32 32, %s18
      $region40: #{encoder_unet_forward.3} parent=27 // pred_fallthru
        _
    $region28: #{encoder_unet_forward.3} parent=5 // pred_fallthru
      _
    %p815 = scmp.le.s32.totalorder 2, %s8
    // Predicated region
    $region41: #{encoder_unet_forward.3} parent=5 // pred_check
      %p816 = pneg %p815
    $region42: #{encoder_unet_forward.3} parent=5 // pred_check_branch
      %818 = sbr.rel (%p816) target = $region44
    $region43: #{encoder_unet_forward.3} parent=5 // pred_region
      %s819 = ssub.s32 %s8, 2
      // Predicated region
      $region45: #{encoder_unet_forward.3} parent=43 // pred_check
        %p820 = pneg %p114
      $region46: #{encoder_unet_forward.3} parent=43 // pred_check_branch
        %822 = sbr.rel (%p820) target = $region48
      $region47: #{encoder_unet_forward.3} parent=43 // pred_region
        %s823 = smul.u32 32, %s21
        %p824 = scmp.lt.s32.totalorder %s823, 63
        %s825 = scalar_select %p824, %s823, 63
        %p826 = scmp.lt.s32.totalorder %s22, 0
        %s827 = scalar_select %p826, %s22, 0
        %s828 = sadd.s32 %s827, %s825
        %s829 = smul.addr %s828, 8
        %s830 = scalar_lea.vmem %s2, %s829
      $region48: #{encoder_unet_forward.3} parent=43 // pred_fallthru
        _
    $region44: #{encoder_unet_forward.3} parent=5 // pred_fallthru
      _
  $region6: #{encoder_unet_forward.3} parent=0 // loop_footer
    %s12 = sadd.s32 1, %s8
  $region7: #{encoder_unet_forward.3} parent=0 // loop_footer_branch
    %7 = sbr.rel target = $region3
  $region8: #{encoder_unet_forward.3} parent=0 // loop_exit
    _

// kernel: encoder_unet_forward.4
$region0: #{encoder_unet_forward.4}
  #allocation0 [shape = 'u32[]', space=smem, size = 0x4, offset = 0x4, fixed_abs, tag = 'smem constant byte address 0x4 - core index']
  #allocation1 [shape = 'u32[144,128]{1,0:T(1,128)}', space=vmem, size = 0x12000, scoped, tag = 'internal scratch']
  #allocation2 [shape = 'f32[176,128]{1,0:T(8,128)}', space=vmem, size = 0x16000, scoped, tag = 'scratch operand']
  %s0 = inlined_call_operand.vmem [shape: bf16[176,512], index: 0, kind: input, shape index: {}]
  %s1 = inlined_call_operand.vmem [shape: bf16[512,128], index: 1, kind: input, shape index: {}]
  %s2 = inlined_call_operand.vmem [shape: f32[176,128], index: 2, kind: output, shape index: {}]
  %s3 = sld [smem:[#allocation0]]
  $region26: #{encoder_unet_forward.4} parent=0
    _
  %s5 = ssub.s32 1, %s3
  %s6 = scalar_select 0, %s5, %s3
  // Predicated region
  $region2: #{encoder_unet_forward.4} parent=0 // pred_check
    _
  $region3: #{encoder_unet_forward.4} parent=0 // pred_check_branch
    %8 = sbr.rel (0) target = $region5
  $region4: #{encoder_unet_forward.4} parent=0 // pred_region
    _
  $region5: #{encoder_unet_forward.4} parent=0 // pred_fallthru
    _
  // Predicated region
  $region6: #{encoder_unet_forward.4} parent=0 // pred_check
    _
  $region7: #{encoder_unet_forward.4} parent=0 // pred_check_branch
    %10 = sbr.rel (0) target = $region9
  $region8: #{encoder_unet_forward.4} parent=0 // pred_region
    _
  $region9: #{encoder_unet_forward.4} parent=0 // pred_fallthru
    _
  %p12 = scmp.eq.s32.totalorder 0, 0
  // Predicated region
  $region10: #{encoder_unet_forward.4} parent=0 // pred_check
    %p13 = pneg %p12
  $region11: #{encoder_unet_forward.4} parent=0 // pred_check_branch
    %15 = sbr.rel (%p13) target = $region13
  $region12: #{encoder_unet_forward.4} parent=0 // pred_region
    %16 = vst [vmem:[#allocation2] sm:$0xff] 0.0
    %17 = vst [vmem:[#allocation2 + $0x8] sm:$0xff] 0.0
    %18 = vst [vmem:[#allocation2 + $0x10] sm:$0xff] 0.0
    %19 = vst [vmem:[#allocation2 + $0x18] sm:$0xff] 0.0
    %20 = vst [vmem:[#allocation2 + $0x20] sm:$0xff] 0.0
    %21 = vst [vmem:[#allocation2 + $0x28] sm:$0xff] 0.0
    %22 = vst [vmem:[#allocation2 + $0x30] sm:$0xff] 0.0
    %23 = vst [vmem:[#allocation2 + $0x38] sm:$0xff] 0.0
    %24 = vst [vmem:[#allocation2 + $0x40] sm:$0xff] 0.0
    %25 = vst [vmem:[#allocation2 + $0x48] sm:$0xff] 0.0
    %26 = vst [vmem:[#allocation2 + $0x50] sm:$0xff] 0.0
    %27 = vst [vmem:[#allocation2 + $0x58] sm:$0xff] 0.0
    %28 = vst [vmem:[#allocation2 + $0x60] sm:$0xff] 0.0
    %29 = vst [vmem:[#allocation2 + $0x68] sm:$0xff] 0.0
    %30 = vst [vmem:[#allocation2 + $0x70] sm:$0xff] 0.0
    %31 = vst [vmem:[#allocation2 + $0x78] sm:$0xff] 0.0
    %32 = vst [vmem:[#allocation2 + $0x80] sm:$0xff] 0.0
    %33 = vst [vmem:[#allocation2 + $0x88] sm:$0xff] 0.0
    %34 = vst [vmem:[#allocation2 + $0x90] sm:$0xff] 0.0
    %35 = vst [vmem:[#allocation2 + $0x98] sm:$0xff] 0.0
    %36 = vst [vmem:[#allocation2 + $0xa0] sm:$0xff] 0.0
    %37 = vst [vmem:[#allocation2 + $0xa8] sm:$0xff] 0.0
  $region13: #{encoder_unet_forward.4} parent=0 // pred_fallthru
    _
  %v38 = vld [vmem:[#allocation2] sm:$0xff]
  %v39 = vld [vmem:[#allocation2 + $0x8] sm:$0xff]
  %v40 = vld [vmem:[#allocation2 + $0x10] sm:$0xff]
  %v41 = vld [vmem:[#allocation2 + $0x18] sm:$0xff]
  %v42 = vld [vmem:[#allocation2 + $0x20] sm:$0xff]
  %v43 = vld [vmem:[#allocation2 + $0x28] sm:$0xff]
  %v44 = vld [vmem:[#allocation2 + $0x30] sm:$0xff]
  %v45 = vld [vmem:[#allocation2 + $0x38] sm:$0xff]
  %v46 = vld [vmem:[#allocation2 + $0x40] sm:$0xff]
  %v47 = vld [vmem:[#allocation2 + $0x48] sm:$0xff]
  %v48 = vld [vmem:[#allocation2 + $0x50] sm:$0xff]
  %v49 = vld [vmem:[#allocation2 + $0x58] sm:$0xff]
  %v50 = vld [vmem:[#allocation2 + $0x60] sm:$0xff]
  %v51 = vld [vmem:[#allocation2 + $0x68] sm:$0xff]
  %v52 = vld [vmem:[#allocation2 + $0x70] sm:$0xff]
  %v53 = vld [vmem:[#allocation2 + $0x78] sm:$0xff]
  %v54 = vld [vmem:[#allocation2 + $0x80] sm:$0xff]
  %v55 = vld [vmem:[#allocation2 + $0x88] sm:$0xff]
  %v56 = vld [vmem:[#allocation2 + $0x90] sm:$0xff]
  %v57 = vld [vmem:[#allocation2 + $0x98] sm:$0xff]
  %v58 = vld [vmem:[#allocation2 + $0xa0] sm:$0xff]
  %v59 = vld [vmem:[#allocation2 + $0xa8] sm:$0xff]
  %v60 = vld [vmem:[%s0] sm:$0xff]
  %v61 = vld [vmem:[%s0 + $0x8] sm:$0xff]
  %v62 = vld [vmem:[%s0 + $0x10] sm:$0xff]
  %v63 = vld [vmem:[%s0 + $0x18] sm:$0xff]
  %v64 = vld [vmem:[%s0 + $0x20] sm:$0xff]
  %v65 = vld [vmem:[%s0 + $0x28] sm:$0xff]
  %v66 = vld [vmem:[%s0 + $0x30] sm:$0xff]
  %v67 = vld [vmem:[%s0 + $0x38] sm:$0xff]
  %v68 = vld [vmem:[%s0 + $0x40] sm:$0xff]
  %v69 = vld [vmem:[%s0 + $0x48] sm:$0xff]
  %v70 = vld [vmem:[%s0 + $0x50] sm:$0xff]
  %v71 = vld [vmem:[%s0 + $0x58] sm:$0xff]
  %v72 = vld [vmem:[%s0 + $0x60] sm:$0xff]
  %v73 = vld [vmem:[%s0 + $0x68] sm:$0xff]
  %v74 = vld [vmem:[%s0 + $0x70] sm:$0xff]
  %v75 = vld [vmem:[%s0 + $0x78] sm:$0xff]
  %v76 = vld [vmem:[%s0 + $0x80] sm:$0xff]
  %v77 = vld [vmem:[%s0 + $0x88] sm:$0xff]
  %v78 = vld [vmem:[%s0 + $0x90] sm:$0xff]
  %v79 = vld [vmem:[%s0 + $0x98] sm:$0xff]
  %v80 = vld [vmem:[%s0 + $0xa0] sm:$0xff]
  %v81 = vld [vmem:[%s0 + $0xa8] sm:$0xff]
  %v82 = vld [vmem:[%s0 + $0xb0] sm:$0xff]
  %v83 = vld [vmem:[%s0 + $0xb8] sm:$0xff]
  %v84 = vld [vmem:[%s0 + $0xc0] sm:$0xff]
  %v85 = vld [vmem:[%s0 + $0xc8] sm:$0xff]
  %v86 = vld [vmem:[%s0 + $0xd0] sm:$0xff]
  %v87 = vld [vmem:[%s0 + $0xd8] sm:$0xff]
  %v88 = vld [vmem:[%s0 + $0xe0] sm:$0xff]
  %v89 = vld [vmem:[%s0 + $0xe8] sm:$0xff]
  %v90 = vld [vmem:[%s0 + $0xf0] sm:$0xff]
  %v91 = vld [vmem:[%s0 + $0xf8] sm:$0xff]
  %v92 = vld [vmem:[%s0 + $0x100] sm:$0xff]
  %v93 = vld [vmem:[%s0 + $0x108] sm:$0xff]
  %v94 = vld [vmem:[%s0 + $0x110] sm:$0xff]
  %v95 = vld [vmem:[%s0 + $0x118] sm:$0xff]
  %v96 = vld [vmem:[%s0 + $0x120] sm:$0xff]
  %v97 = vld [vmem:[%s0 + $0x128] sm:$0xff]
  %v98 = vld [vmem:[%s0 + $0x130] sm:$0xff]
  %v99 = vld [vmem:[%s0 + $0x138] sm:$0xff]
  %v100 = vld [vmem:[%s0 + $0x140] sm:$0xff]
  %v101 = vld [vmem:[%s0 + $0x148] sm:$0xff]
  %v102 = vld [vmem:[%s0 + $0x150] sm:$0xff]
  %v103 = vld [vmem:[%s0 + $0x158] sm:$0xff]
  %v104 = vld [vmem:[%s1] sm:$0xf]
  %v105 = vld [vmem:[%s1 + $0x4] sm:$0xf]
  %v106 = vld [vmem:[%s1 + $0x8] sm:$0xf]
  %v107 = vld [vmem:[%s1 + $0xc] sm:$0xf]
  %v108 = vld [vmem:[%s1 + $0x10] sm:$0xf]
  %v109 = vld [vmem:[%s1 + $0x14] sm:$0xf]
  %v110 = vld [vmem:[%s1 + $0x18] sm:$0xf]
  %v111 = vld [vmem:[%s1 + $0x1c] sm:$0xf]
  %v112 = vld [vmem:[%s1 + $0x20] sm:$0xf]
  %v113 = vld [vmem:[%s1 + $0x24] sm:$0xf]
  %v114 = vld [vmem:[%s1 + $0x28] sm:$0xf]
  %v115 = vld [vmem:[%s1 + $0x2c] sm:$0xf]
  %v116 = vld [vmem:[%s1 + $0x30] sm:$0xf]
  %v117 = vld [vmem:[%s1 + $0x34] sm:$0xf]
  %v118 = vld [vmem:[%s1 + $0x38] sm:$0xf]
  %v119 = vld [vmem:[%s1 + $0x3c] sm:$0xf]
  %v120 = vld [vmem:[%s1 + $0x40] sm:$0xf]
  %v121 = vld [vmem:[%s1 + $0x44] sm:$0xf]
  %v122 = vld [vmem:[%s1 + $0x48] sm:$0xf]
  %v123 = vld [vmem:[%s1 + $0x4c] sm:$0xf]
  %v124 = vld [vmem:[%s1 + $0x50] sm:$0xf]
  %v125 = vld [vmem:[%s1 + $0x54] sm:$0xf]
  %v126 = vld [vmem:[%s1 + $0x58] sm:$0xf]
  %v127 = vld [vmem:[%s1 + $0x5c] sm:$0xf]
  %v128 = vld [vmem:[%s1 + $0x60] sm:$0xf]
  %v129 = vld [vmem:[%s1 + $0x64] sm:$0xf]
  %v130 = vld [vmem:[%s1 + $0x68] sm:$0xf]
  %v131 = vld [vmem:[%s1 + $0x6c] sm:$0xf]
  %v132 = vld [vmem:[%s1 + $0x70] sm:$0xf]
  %v133 = vld [vmem:[%s1 + $0x74] sm:$0xf]
  %v134 = vld [vmem:[%s1 + $0x78] sm:$0xf]
  %v135 = vld [vmem:[%s1 + $0x7c] sm:$0xf]
  %v136 = vld [vmem:[%s1 + $0x80] sm:$0xf]
  %v137 = vld [vmem:[%s1 + $0x84] sm:$0xf]
  %v138 = vld [vmem:[%s1 + $0x88] sm:$0xf]
  %v139 = vld [vmem:[%s1 + $0x8c] sm:$0xf]
  %v140 = vld [vmem:[%s1 + $0x90] sm:$0xf]
  %v141 = vld [vmem:[%s1 + $0x94] sm:$0xf]
  %v142 = vld [vmem:[%s1 + $0x98] sm:$0xf]
  %v143 = vld [vmem:[%s1 + $0x9c] sm:$0xf]
  %v144 = vld [vmem:[%s1 + $0xa0] sm:$0xf]
  %v145 = vld [vmem:[%s1 + $0xa4] sm:$0xf]
  %v146 = vld [vmem:[%s1 + $0xa8] sm:$0xf]
  %v147 = vld [vmem:[%s1 + $0xac] sm:$0xf]
  %v148 = vld [vmem:[%s1 + $0xb0] sm:$0xf]
  %v149 = vld [vmem:[%s1 + $0xb4] sm:$0xf]
  %v150 = vld [vmem:[%s1 + $0xb8] sm:$0xf]
  %v151 = vld [vmem:[%s1 + $0xbc] sm:$0xf]
  %v152 = vld [vmem:[%s1 + $0xc0] sm:$0xf]
  %v153 = vld [vmem:[%s1 + $0xc4] sm:$0xf]
  %v154 = vld [vmem:[%s1 + $0xc8] sm:$0xf]
  %v155 = vld [vmem:[%s1 + $0xcc] sm:$0xf]
  %v156 = vld [vmem:[%s1 + $0xd0] sm:$0xf]
  %v157 = vld [vmem:[%s1 + $0xd4] sm:$0xf]
  %v158 = vld [vmem:[%s1 + $0xd8] sm:$0xf]
  %v159 = vld [vmem:[%s1 + $0xdc] sm:$0xf]
  %v160 = vld [vmem:[%s1 + $0xe0] sm:$0xf]
  %v161 = vld [vmem:[%s1 + $0xe4] sm:$0xf]
  %v162 = vld [vmem:[%s1 + $0xe8] sm:$0xf]
  %v163 = vld [vmem:[%s1 + $0xec] sm:$0xf]
  %v164 = vld [vmem:[%s1 + $0xf0] sm:$0xf]
  %v165 = vld [vmem:[%s1 + $0xf4] sm:$0xf]
  %v166 = vld [vmem:[%s1 + $0xf8] sm:$0xf]
  %v167 = vld [vmem:[%s1 + $0xfc] sm:$0xf]
  %v212 = vunpack.c.l.b16 %v60
  %v213 = vunpack.c.h.b16 %v60
  %v214 = vunpack.c.l.b16 %v61
  %v215 = vunpack.c.h.b16 %v61
  %v216 = vunpack.c.l.b16 %v62
  %v217 = vunpack.c.h.b16 %v62
  %v218 = vunpack.c.l.b16 %v63
  %v219 = vunpack.c.h.b16 %v63
  %v220 = vunpack.c.l.b16 %v64
  %v221 = vunpack.c.h.b16 %v64
  %v222 = vunpack.c.l.b16 %v65
  %v223 = vunpack.c.h.b16 %v65
  %v224 = vunpack.c.l.b16 %v66
  %v225 = vunpack.c.h.b16 %v66
  %v226 = vunpack.c.l.b16 %v67
  %v227 = vunpack.c.h.b16 %v67
  %v228 = vunpack.c.l.b16 %v68
  %v229 = vunpack.c.h.b16 %v68
  %v230 = vunpack.c.l.b16 %v69
  %v231 = vunpack.c.h.b16 %v69
  %v232 = vunpack.c.l.b16 %v70
  %v233 = vunpack.c.h.b16 %v70
  %v234 = vunpack.c.l.b16 %v71
  %v235 = vunpack.c.h.b16 %v71
  %v236 = vunpack.c.l.b16 %v72
  %v237 = vunpack.c.h.b16 %v72
  %v238 = vunpack.c.l.b16 %v73
  %v239 = vunpack.c.h.b16 %v73
  %v240 = vunpack.c.l.b16 %v74
  %v241 = vunpack.c.h.b16 %v74
  %v242 = vunpack.c.l.b16 %v75
  %v243 = vunpack.c.h.b16 %v75
  %v244 = vunpack.c.l.b16 %v76
  %v245 = vunpack.c.h.b16 %v76
  %v246 = vunpack.c.l.b16 %v77
  %v247 = vunpack.c.h.b16 %v77
  %v248 = vunpack.c.l.b16 %v78
  %v249 = vunpack.c.h.b16 %v78
  %v250 = vunpack.c.l.b16 %v79
  %v251 = vunpack.c.h.b16 %v79
  %v252 = vunpack.c.l.b16 %v80
  %v253 = vunpack.c.h.b16 %v80
  %v254 = vunpack.c.l.b16 %v81
  %v255 = vunpack.c.h.b16 %v81
  %v256 = vunpack.c.l.b16 %v82
  %v257 = vunpack.c.h.b16 %v82
  %v258 = vunpack.c.l.b16 %v83
  %v259 = vunpack.c.h.b16 %v83
  %v260 = vunpack.c.l.b16 %v84
  %v261 = vunpack.c.h.b16 %v84
  %v262 = vunpack.c.l.b16 %v85
  %v263 = vunpack.c.h.b16 %v85
  %v264 = vunpack.c.l.b16 %v86
  %v265 = vunpack.c.h.b16 %v86
  %v266 = vunpack.c.l.b16 %v87
  %v267 = vunpack.c.h.b16 %v87
  %v268 = vunpack.c.l.b16 %v88
  %v269 = vunpack.c.h.b16 %v88
  %v270 = vunpack.c.l.b16 %v89
  %v271 = vunpack.c.h.b16 %v89
  %v272 = vunpack.c.l.b16 %v90
  %v273 = vunpack.c.h.b16 %v90
  %v274 = vunpack.c.l.b16 %v91
  %v275 = vunpack.c.h.b16 %v91
  %v276 = vunpack.c.l.b16 %v92
  %v277 = vunpack.c.h.b16 %v92
  %v278 = vunpack.c.l.b16 %v93
  %v279 = vunpack.c.h.b16 %v93
  %v280 = vunpack.c.l.b16 %v94
  %v281 = vunpack.c.h.b16 %v94
  %v282 = vunpack.c.l.b16 %v95
  %v283 = vunpack.c.h.b16 %v95
  %v284 = vunpack.c.l.b16 %v96
  %v285 = vunpack.c.h.b16 %v96
  %v286 = vunpack.c.l.b16 %v97
  %v287 = vunpack.c.h.b16 %v97
  %v288 = vunpack.c.l.b16 %v98
  %v289 = vunpack.c.h.b16 %v98
  %v290 = vunpack.c.l.b16 %v99
  %v291 = vunpack.c.h.b16 %v99
  %v292 = vunpack.c.l.b16 %v100
  %v293 = vunpack.c.h.b16 %v100
  %v294 = vunpack.c.l.b16 %v101
  %v295 = vunpack.c.h.b16 %v101
  %v296 = vunpack.c.l.b16 %v102
  %v297 = vunpack.c.h.b16 %v102
  %v298 = vunpack.c.l.b16 %v103
  %v299 = vunpack.c.h.b16 %v103
  %v300 = vpack.c.b16 %v216, %v212
  %v301 = vpack.c.b16 %v217, %v213
  %v302 = vpack.c.b16 %v218, %v214
  %v303 = vpack.c.b16 %v219, %v215
  %v304 = vpack.c.b16 %v224, %v220
  %v305 = vpack.c.b16 %v225, %v221
  %v306 = vpack.c.b16 %v226, %v222
  %v307 = vpack.c.b16 %v227, %v223
  %v308 = vpack.c.b16 %v232, %v228
  %v309 = vpack.c.b16 %v233, %v229
  %v310 = vpack.c.b16 %v234, %v230
  %v311 = vpack.c.b16 %v235, %v231
  %v312 = vpack.c.b16 %v240, %v236
  %v313 = vpack.c.b16 %v241, %v237
  %v314 = vpack.c.b16 %v242, %v238
  %v315 = vpack.c.b16 %v243, %v239
  %v316 = vpack.c.b16 %v248, %v244
  %v317 = vpack.c.b16 %v249, %v245
  %v318 = vpack.c.b16 %v250, %v246
  %v319 = vpack.c.b16 %v251, %v247
  %v320 = vpack.c.b16 %v256, %v252
  %v321 = vpack.c.b16 %v257, %v253
  %v322 = vpack.c.b16 %v258, %v254
  %v323 = vpack.c.b16 %v259, %v255
  %v324 = vpack.c.b16 %v264, %v260
  %v325 = vpack.c.b16 %v265, %v261
  %v326 = vpack.c.b16 %v266, %v262
  %v327 = vpack.c.b16 %v267, %v263
  %v328 = vpack.c.b16 %v272, %v268
  %v329 = vpack.c.b16 %v273, %v269
  %v330 = vpack.c.b16 %v274, %v270
  %v331 = vpack.c.b16 %v275, %v271
  %v332 = vpack.c.b16 %v280, %v276
  %v333 = vpack.c.b16 %v281, %v277
  %v334 = vpack.c.b16 %v282, %v278
  %v335 = vpack.c.b16 %v283, %v279
  %v336 = vpack.c.b16 %v288, %v284
  %v337 = vpack.c.b16 %v289, %v285
  %v338 = vpack.c.b16 %v290, %v286
  %v339 = vpack.c.b16 %v291, %v287
  %v340 = vpack.c.b16 %v296, %v292
  %v341 = vpack.c.b16 %v297, %v293
  %v342 = vpack.c.b16 %v298, %v294
  %v343 = vpack.c.b16 %v299, %v295
  %v452 = vunpack.c.l.b16 %v104
  %v453 = vunpack.c.l.b16 %v105
  %v454 = vunpack.c.l.b16 %v106
  %v455 = vunpack.c.l.b16 %v107
  %v456 = vunpack.c.l.b16 %v108
  %v457 = vunpack.c.l.b16 %v109
  %v458 = vunpack.c.l.b16 %v110
  %v459 = vunpack.c.l.b16 %v111
  %v460 = vunpack.c.l.b16 %v112
  %v461 = vunpack.c.l.b16 %v113
  %v462 = vunpack.c.l.b16 %v114
  %v463 = vunpack.c.l.b16 %v115
  %v464 = vunpack.c.l.b16 %v116
  %v465 = vunpack.c.l.b16 %v117
  %v466 = vunpack.c.l.b16 %v118
  %v467 = vunpack.c.l.b16 %v119
  %v468 = vunpack.c.l.b16 %v120
  %v469 = vunpack.c.l.b16 %v121
  %v470 = vunpack.c.l.b16 %v122
  %v471 = vunpack.c.l.b16 %v123
  %v472 = vunpack.c.l.b16 %v124
  %v473 = vunpack.c.l.b16 %v125
  %v474 = vunpack.c.l.b16 %v126
  %v475 = vunpack.c.l.b16 %v127
  %v476 = vunpack.c.l.b16 %v128
  %v477 = vunpack.c.l.b16 %v129
  %v478 = vunpack.c.l.b16 %v130
  %v479 = vunpack.c.l.b16 %v131
  %v480 = vunpack.c.l.b16 %v132
  %v481 = vunpack.c.l.b16 %v133
  %v482 = vunpack.c.l.b16 %v134
  %v483 = vunpack.c.l.b16 %v135
  %v484 = vunpack.c.l.b16 %v136
  %v485 = vunpack.c.l.b16 %v137
  %v486 = vunpack.c.l.b16 %v138
  %v487 = vunpack.c.l.b16 %v139
  %v488 = vunpack.c.l.b16 %v140
  %v489 = vunpack.c.l.b16 %v141
  %v490 = vunpack.c.l.b16 %v142
  %v491 = vunpack.c.l.b16 %v143
  %v492 = vunpack.c.l.b16 %v144
  %v493 = vunpack.c.l.b16 %v145
  %v494 = vunpack.c.l.b16 %v146
  %v495 = vunpack.c.l.b16 %v147
  %v496 = vunpack.c.l.b16 %v148
  %v497 = vunpack.c.l.b16 %v149
  %v498 = vunpack.c.l.b16 %v150
  %v499 = vunpack.c.l.b16 %v151
  %v500 = vunpack.c.l.b16 %v152
  %v501 = vunpack.c.l.b16 %v153
  %v502 = vunpack.c.l.b16 %v154
  %v503 = vunpack.c.l.b16 %v155
  %v504 = vunpack.c.l.b16 %v156
  %v505 = vunpack.c.l.b16 %v157
  %v506 = vunpack.c.l.b16 %v158
  %v507 = vunpack.c.l.b16 %v159
  %v508 = vunpack.c.l.b16 %v160
  %v509 = vunpack.c.l.b16 %v161
  %v510 = vunpack.c.l.b16 %v162
  %v511 = vunpack.c.l.b16 %v163
  %v512 = vunpack.c.l.b16 %v164
  %v513 = vunpack.c.l.b16 %v165
  %v514 = vunpack.c.l.b16 %v166
  %v515 = vunpack.c.l.b16 %v167
  %v516 = vpack.c.b16 %v453, %v452
  %v517 = vpack.c.b16 %v455, %v454
  %v518 = vpack.c.b16 %v457, %v456
  %v519 = vpack.c.b16 %v459, %v458
  %v520 = vpack.c.b16 %v461, %v460
  %v521 = vpack.c.b16 %v463, %v462
  %v522 = vpack.c.b16 %v465, %v464
  %v523 = vpack.c.b16 %v467, %v466
  %v524 = vpack.c.b16 %v469, %v468
  %v525 = vpack.c.b16 %v471, %v470
  %v526 = vpack.c.b16 %v473, %v472
  %v527 = vpack.c.b16 %v475, %v474
  %v528 = vpack.c.b16 %v477, %v476
  %v529 = vpack.c.b16 %v479, %v478
  %v530 = vpack.c.b16 %v481, %v480
  %v531 = vpack.c.b16 %v483, %v482
  %v532 = vpack.c.b16 %v485, %v484
  %v533 = vpack.c.b16 %v487, %v486
  %v534 = vpack.c.b16 %v489, %v488
  %v535 = vpack.c.b16 %v491, %v490
  %v536 = vpack.c.b16 %v493, %v492
  %v537 = vpack.c.b16 %v495, %v494
  %v538 = vpack.c.b16 %v497, %v496
  %v539 = vpack.c.b16 %v499, %v498
  %v540 = vpack.c.b16 %v501, %v500
  %v541 = vpack.c.b16 %v503, %v502
  %v542 = vpack.c.b16 %v505, %v504
  %v543 = vpack.c.b16 %v507, %v506
  %v544 = vpack.c.b16 %v509, %v508
  %v545 = vpack.c.b16 %v511, %v510
  %v546 = vpack.c.b16 %v513, %v512
  %v547 = vpack.c.b16 %v515, %v514
  %580 = vmatprep.subr.bf16.mxu0 0
  %581 = vmatpush1.bf16.msra.mxu0 %v523
  %582 = vmatprep.subr.bf16.mxu0 0
  %583 = vmatpush1.bf16.msra.mxu0 %v522
  %584 = vmatprep.subr.bf16.mxu0 0
  %585 = vmatpush1.bf16.msra.mxu0 %v521
  %586 = vmatprep.subr.bf16.mxu0 0
  %587 = vmatpush1.bf16.msra.mxu0 %v520
  %588 = vmatprep.subr.bf16.mxu0 0
  %589 = vmatpush1.bf16.msra.mxu0 %v519
  %590 = vmatprep.subr.bf16.mxu0 0
  %591 = vmatpush1.bf16.msra.mxu0 %v518
  %592 = vmatprep.subr.bf16.mxu0 0
  %593 = vmatpush1.bf16.msra.mxu0 %v517
  %594 = vmatprep.subr.bf16.mxu0 0
  %595 = vmatpush1.bf16.msra.mxu0 %v516
  %596 = vmatprep.subr.bf16.mxu0 0
  %597 = vmatpush2.bf16.msra.mxu0 %v531
  %598 = vmatprep.subr.bf16.mxu0 0
  %599 = vmatpush2.bf16.msra.mxu0 %v530
  %600 = vmatprep.subr.bf16.mxu0 0
  %601 = vmatpush2.bf16.msra.mxu0 %v529
  %602 = vmatprep.subr.bf16.mxu0 0
  %603 = vmatpush2.bf16.msra.mxu0 %v528
  %604 = vmatprep.subr.bf16.mxu0 0
  %605 = vmatpush2.bf16.msra.mxu0 %v527
  %606 = vmatprep.subr.bf16.mxu0 0
  %607 = vmatpush2.bf16.msra.mxu0 %v526
  %608 = vmatprep.subr.bf16.mxu0 0
  %609 = vmatpush2.bf16.msra.mxu0 %v525
  %610 = vmatprep.subr.bf16.mxu0 0
  %611 = vmatpush2.bf16.msra.mxu0 %v524
  %612 = vmatprep.mubr.bf16.mxu0 %v301
  %613 = vmatmul.mubr.bf16.gmra.mxu0 %v300
  %v614 = vpop.f32.mrf.mxu0
  %v615 = vadd.f32 0.0, %v614
  %v616 = vpop.f32.mrf.mxu0
  %v617 = vpop.f32.mrf.mxu0
  %v618 = vadd.f32 0.0, %v617
  %v619 = vpop.f32.mrf.mxu0
  %620 = vmatprep.mubr.bf16.mxu0 %v305
  %621 = vmatmul.mubr.bf16.gmra.mxu0 %v304
  %v622 = vpop.f32.mrf.mxu0
  %v623 = vadd.f32 0.0, %v622
  %v624 = vpop.f32.mrf.mxu0
  %v625 = vpop.f32.mrf.mxu0
  %v626 = vadd.f32 0.0, %v625
  %v627 = vpop.f32.mrf.mxu0
  %628 = vmatprep.mubr.bf16.mxu0 %v309
  %629 = vmatmul.mubr.bf16.gmra.mxu0 %v308
  %v630 = vpop.f32.mrf.mxu0
  %v631 = vadd.f32 0.0, %v630
  %v632 = vpop.f32.mrf.mxu0
  %v633 = vpop.f32.mrf.mxu0
  %v634 = vadd.f32 0.0, %v633
  %v635 = vpop.f32.mrf.mxu0
  %636 = vmatprep.mubr.bf16.mxu0 %v313
  %637 = vmatmul.mubr.bf16.gmra.mxu0 %v312
  %v638 = vpop.f32.mrf.mxu0
  %v639 = vadd.f32 0.0, %v638
  %v640 = vpop.f32.mrf.mxu0
  %v641 = vpop.f32.mrf.mxu0
  %v642 = vadd.f32 0.0, %v641
  %v643 = vpop.f32.mrf.mxu0
  %644 = vmatprep.mubr.bf16.mxu0 %v317
  %645 = vmatmul.mubr.bf16.gmra.mxu0 %v316
  %v646 = vpop.f32.mrf.mxu0
  %v647 = vadd.f32 0.0, %v646
  %v648 = vpop.f32.mrf.mxu0
  %v649 = vpop.f32.mrf.mxu0
  %v650 = vadd.f32 0.0, %v649
  %v651 = vpop.f32.mrf.mxu0
  %652 = vmatprep.mubr.bf16.mxu0 %v321
  %653 = vmatmul.mubr.bf16.gmra.mxu0 %v320
  %v654 = vpop.f32.mrf.mxu0
  %v655 = vadd.f32 0.0, %v654
  %v656 = vpop.f32.mrf.mxu0
  %v657 = vpop.f32.mrf.mxu0
  %v658 = vadd.f32 0.0, %v657
  %v659 = vpop.f32.mrf.mxu0
  %660 = vmatprep.mubr.bf16.mxu0 %v325
  %661 = vmatmul.mubr.bf16.gmra.mxu0 %v324
  %v662 = vpop.f32.mrf.mxu0
  %v663 = vadd.f32 0.0, %v662
  %v664 = vpop.f32.mrf.mxu0
  %v665 = vpop.f32.mrf.mxu0
  %v666 = vadd.f32 0.0, %v665
  %v667 = vpop.f32.mrf.mxu0
  %668 = vmatprep.mubr.bf16.mxu0 %v329
  %669 = vmatmul.mubr.bf16.gmra.mxu0 %v328
  %v670 = vpop.f32.mrf.mxu0
  %v671 = vadd.f32 0.0, %v670
  %v672 = vpop.f32.mrf.mxu0
  %v673 = vpop.f32.mrf.mxu0
  %v674 = vadd.f32 0.0, %v673
  %v675 = vpop.f32.mrf.mxu0
  %676 = vmatprep.mubr.bf16.mxu0 %v333
  %677 = vmatmul.mubr.bf16.gmra.mxu0 %v332
  %v678 = vpop.f32.mrf.mxu0
  %v679 = vadd.f32 0.0, %v678
  %v680 = vpop.f32.mrf.mxu0
  %v681 = vpop.f32.mrf.mxu0
  %v682 = vadd.f32 0.0, %v681
  %v683 = vpop.f32.mrf.mxu0
  %684 = vmatprep.mubr.bf16.mxu0 %v337
  %685 = vmatmul.mubr.bf16.gmra.mxu0 %v336
  %v686 = vpop.f32.mrf.mxu0
  %v687 = vadd.f32 0.0, %v686
  %v688 = vpop.f32.mrf.mxu0
  %v689 = vpop.f32.mrf.mxu0
  %v690 = vadd.f32 0.0, %v689
  %v691 = vpop.f32.mrf.mxu0
  %692 = vmatprep.mubr.bf16.mxu0 %v341
  %693 = vmatmul.mubr.bf16.gmra.mxu0 %v340
  %v694 = vpop.f32.mrf.mxu0
  %v695 = vadd.f32 0.0, %v694
  %v696 = vpop.f32.mrf.mxu0
  %v697 = vpop.f32.mrf.mxu0
  %v698 = vadd.f32 0.0, %v697
  %v699 = vpop.f32.mrf.mxu0
  %700 = vdwg.mxu0
  %701 = vmatprep.subr.bf16.mxu0 0
  %702 = vmatpush1.bf16.msra.mxu0 %v539
  %703 = vmatprep.subr.bf16.mxu0 0
  %704 = vmatpush1.bf16.msra.mxu0 %v538
  %705 = vmatprep.subr.bf16.mxu0 0
  %706 = vmatpush1.bf16.msra.mxu0 %v537
  %707 = vmatprep.subr.bf16.mxu0 0
  %708 = vmatpush1.bf16.msra.mxu0 %v536
  %709 = vmatprep.subr.bf16.mxu0 0
  %710 = vmatpush1.bf16.msra.mxu0 %v535
  %711 = vmatprep.subr.bf16.mxu0 0
  %712 = vmatpush1.bf16.msra.mxu0 %v534
  %713 = vmatprep.subr.bf16.mxu0 0
  %714 = vmatpush1.bf16.msra.mxu0 %v533
  %715 = vmatprep.subr.bf16.mxu0 0
  %716 = vmatpush1.bf16.msra.mxu0 %v532
  %717 = vmatprep.subr.bf16.mxu0 0
  %718 = vmatpush2.bf16.msra.mxu0 %v547
  %719 = vmatprep.subr.bf16.mxu0 0
  %720 = vmatpush2.bf16.msra.mxu0 %v546
  %721 = vmatprep.subr.bf16.mxu0 0
  %722 = vmatpush2.bf16.msra.mxu0 %v545
  %723 = vmatprep.subr.bf16.mxu0 0
  %724 = vmatpush2.bf16.msra.mxu0 %v544
  %725 = vmatprep.subr.bf16.mxu0 0
  %726 = vmatpush2.bf16.msra.mxu0 %v543
  %727 = vmatprep.subr.bf16.mxu0 0
  %728 = vmatpush2.bf16.msra.mxu0 %v542
  %729 = vmatprep.subr.bf16.mxu0 0
  %730 = vmatpush2.bf16.msra.mxu0 %v541
  %731 = vmatprep.subr.bf16.mxu0 0
  %732 = vmatpush2.bf16.msra.mxu0 %v540
  %733 = vmatprep.mubr.bf16.mxu0 %v303
  %734 = vmatmul.mubr.bf16.gmra.mxu0 %v302
  %v735 = vpop.f32.mrf.mxu0
  %v736 = vadd.f32 %v615, %v735
  %v737 = vpop.f32.mrf.mxu0
  %v738 = vpop.f32.mrf.mxu0
  %v739 = vadd.f32 %v618, %v738
  %v740 = vpop.f32.mrf.mxu0
  %741 = vmatprep.mubr.bf16.mxu0 %v307
  %742 = vmatmul.mubr.bf16.gmra.mxu0 %v306
  %v743 = vpop.f32.mrf.mxu0
  %v744 = vadd.f32 %v623, %v743
  %v745 = vpop.f32.mrf.mxu0
  %v746 = vpop.f32.mrf.mxu0
  %v747 = vadd.f32 %v626, %v746
  %v748 = vpop.f32.mrf.mxu0
  %749 = vmatprep.mubr.bf16.mxu0 %v311
  %750 = vmatmul.mubr.bf16.gmra.mxu0 %v310
  %v751 = vpop.f32.mrf.mxu0
  %v752 = vadd.f32 %v631, %v751
  %v753 = vpop.f32.mrf.mxu0
  %v754 = vpop.f32.mrf.mxu0
  %v755 = vadd.f32 %v634, %v754
  %v756 = vpop.f32.mrf.mxu0
  %757 = vmatprep.mubr.bf16.mxu0 %v315
  %758 = vmatmul.mubr.bf16.gmra.mxu0 %v314
  %v759 = vpop.f32.mrf.mxu0
  %v760 = vadd.f32 %v639, %v759
  %v761 = vpop.f32.mrf.mxu0
  %v762 = vpop.f32.mrf.mxu0
  %v763 = vadd.f32 %v642, %v762
  %v764 = vpop.f32.mrf.mxu0
  %765 = vmatprep.mubr.bf16.mxu0 %v319
  %766 = vmatmul.mubr.bf16.gmra.mxu0 %v318
  %v767 = vpop.f32.mrf.mxu0
  %v768 = vadd.f32 %v647, %v767
  %v769 = vpop.f32.mrf.mxu0
  %v770 = vpop.f32.mrf.mxu0
  %v771 = vadd.f32 %v650, %v770
  %v772 = vpop.f32.mrf.mxu0
  %773 = vmatprep.mubr.bf16.mxu0 %v323
  %774 = vmatmul.mubr.bf16.gmra.mxu0 %v322
  %v775 = vpop.f32.mrf.mxu0
  %v776 = vadd.f32 %v655, %v775
  %v777 = vpop.f32.mrf.mxu0
  %v778 = vpop.f32.mrf.mxu0
  %v779 = vadd.f32 %v658, %v778
  %v780 = vpop.f32.mrf.mxu0
  %781 = vmatprep.mubr.bf16.mxu0 %v327
  %782 = vmatmul.mubr.bf16.gmra.mxu0 %v326
  %v783 = vpop.f32.mrf.mxu0
  %v784 = vadd.f32 %v663, %v783
  %v785 = vpop.f32.mrf.mxu0
  %v786 = vpop.f32.mrf.mxu0
  %v787 = vadd.f32 %v666, %v786
  %v788 = vpop.f32.mrf.mxu0
  %789 = vmatprep.mubr.bf16.mxu0 %v331
  %790 = vmatmul.mubr.bf16.gmra.mxu0 %v330
  %v791 = vpop.f32.mrf.mxu0
  %v792 = vadd.f32 %v671, %v791
  %v793 = vpop.f32.mrf.mxu0
  %v794 = vpop.f32.mrf.mxu0
  %v795 = vadd.f32 %v674, %v794
  %v796 = vpop.f32.mrf.mxu0
  %797 = vmatprep.mubr.bf16.mxu0 %v335
  %798 = vmatmul.mubr.bf16.gmra.mxu0 %v334
  %v799 = vpop.f32.mrf.mxu0
  %v800 = vadd.f32 %v679, %v799
  %v801 = vpop.f32.mrf.mxu0
  %v802 = vpop.f32.mrf.mxu0
  %v803 = vadd.f32 %v682, %v802
  %v804 = vpop.f32.mrf.mxu0
  %805 = vmatprep.mubr.bf16.mxu0 %v339
  %806 = vmatmul.mubr.bf16.gmra.mxu0 %v338
  %v807 = vpop.f32.mrf.mxu0
  %v808 = vadd.f32 %v687, %v807
  %v809 = vpop.f32.mrf.mxu0
  %v810 = vpop.f32.mrf.mxu0
  %v811 = vadd.f32 %v690, %v810
  %v812 = vpop.f32.mrf.mxu0
  %813 = vmatprep.mubr.bf16.mxu0 %v343
  %814 = vmatmul.mubr.bf16.gmra.mxu0 %v342
  %v815 = vpop.f32.mrf.mxu0
  %v816 = vadd.f32 %v695, %v815
  %v817 = vpop.f32.mrf.mxu0
  %v818 = vpop.f32.mrf.mxu0
  %v819 = vadd.f32 %v698, %v818
  %v820 = vpop.f32.mrf.mxu0
  %821 = vdwg.mxu0
  %v822 = vadd.f32 %v38, %v736
  %v823 = vadd.f32 %v39, %v739
  %v824 = vadd.f32 %v40, %v744
  %v825 = vadd.f32 %v41, %v747
  %v826 = vadd.f32 %v42, %v752
  %v827 = vadd.f32 %v43, %v755
  %v828 = vadd.f32 %v44, %v760
  %v829 = vadd.f32 %v45, %v763
  %v830 = vadd.f32 %v46, %v768
  %v831 = vadd.f32 %v47, %v771
  %v832 = vadd.f32 %v48, %v776
  %v833 = vadd.f32 %v49, %v779
  %v834 = vadd.f32 %v50, %v784
  %v835 = vadd.f32 %v51, %v787
  %v836 = vadd.f32 %v52, %v792
  %v837 = vadd.f32 %v53, %v795
  %v838 = vadd.f32 %v54, %v800
  %v839 = vadd.f32 %v55, %v803
  %v840 = vadd.f32 %v56, %v808
  %v841 = vadd.f32 %v57, %v811
  %v842 = vadd.f32 %v58, %v816
  %v843 = vadd.f32 %v59, %v819
  %844 = vst [vmem:[#allocation2] sm:$0xff] %v822
  %845 = vst [vmem:[#allocation2 + $0x8] sm:$0xff] %v823
  %846 = vst [vmem:[#allocation2 + $0x10] sm:$0xff] %v824
  %847 = vst [vmem:[#allocation2 + $0x18] sm:$0xff] %v825
  %848 = vst [vmem:[#allocation2 + $0x20] sm:$0xff] %v826
  %849 = vst [vmem:[#allocation2 + $0x28] sm:$0xff] %v827
  %850 = vst [vmem:[#allocation2 + $0x30] sm:$0xff] %v828
  %851 = vst [vmem:[#allocation2 + $0x38] sm:$0xff] %v829
  %852 = vst [vmem:[#allocation2 + $0x40] sm:$0xff] %v830
  %853 = vst [vmem:[#allocation2 + $0x48] sm:$0xff] %v831
  %854 = vst [vmem:[#allocation2 + $0x50] sm:$0xff] %v832
  %855 = vst [vmem:[#allocation2 + $0x58] sm:$0xff] %v833
  %856 = vst [vmem:[#allocation2 + $0x60] sm:$0xff] %v834
  %857 = vst [vmem:[#allocation2 + $0x68] sm:$0xff] %v835
  %858 = vst [vmem:[#allocation2 + $0x70] sm:$0xff] %v836
  %859 = vst [vmem:[#allocation2 + $0x78] sm:$0xff] %v837
  %860 = vst [vmem:[#allocation2 + $0x80] sm:$0xff] %v838
  %861 = vst [vmem:[#allocation2 + $0x88] sm:$0xff] %v839
  %862 = vst [vmem:[#allocation2 + $0x90] sm:$0xff] %v840
  %863 = vst [vmem:[#allocation2 + $0x98] sm:$0xff] %v841
  %864 = vst [vmem:[#allocation2 + $0xa0] sm:$0xff] %v842
  %865 = vst [vmem:[#allocation2 + $0xa8] sm:$0xff] %v843
  // Predicated region
  $region14: #{encoder_unet_forward.4} parent=0 // pred_check
    %p866 = pneg %p12
  $region15: #{encoder_unet_forward.4} parent=0 // pred_check_branch
    %868 = sbr.rel (%p866) target = $region17
  $region16: #{encoder_unet_forward.4} parent=0 // pred_region
    %v869 = vld [vmem:[#allocation2] sm:$0xff]
    %v870 = vld [vmem:[#allocation2 + $0x8] sm:$0xff]
    %v871 = vld [vmem:[#allocation2 + $0x10] sm:$0xff]
    %v872 = vld [vmem:[#allocation2 + $0x18] sm:$0xff]
    %v873 = vld [vmem:[#allocation2 + $0x20] sm:$0xff]
    %v874 = vld [vmem:[#allocation2 + $0x28] sm:$0xff]
    %v875 = vld [vmem:[#allocation2 + $0x30] sm:$0xff]
    %v876 = vld [vmem:[#allocation2 + $0x38] sm:$0xff]
    %v877 = vld [vmem:[#allocation2 + $0x40] sm:$0xff]
    %v878 = vld [vmem:[#allocation2 + $0x48] sm:$0xff]
    %v879 = vld [vmem:[#allocation2 + $0x50] sm:$0xff]
    %v880 = vld [vmem:[#allocation2 + $0x58] sm:$0xff]
    %v881 = vld [vmem:[#allocation2 + $0x60] sm:$0xff]
    %v882 = vld [vmem:[#allocation2 + $0x68] sm:$0xff]
    %v883 = vld [vmem:[#allocation2 + $0x70] sm:$0xff]
    %v884 = vld [vmem:[#allocation2 + $0x78] sm:$0xff]
    %v885 = vld [vmem:[#allocation2 + $0x80] sm:$0xff]
    %v886 = vld [vmem:[#allocation2 + $0x88] sm:$0xff]
    %v887 = vld [vmem:[#allocation2 + $0x90] sm:$0xff]
    %v888 = vld [vmem:[#allocation2 + $0x98] sm:$0xff]
    %v889 = vld [vmem:[#allocation2 + $0xa0] sm:$0xff]
    %v890 = vld [vmem:[#allocation2 + $0xa8] sm:$0xff]
    %v891 = vmax.f32 %v869, 0.0
    %v892 = vmax.f32 %v870, 0.0
    %v893 = vmax.f32 %v871, 0.0
    %v894 = vmax.f32 %v872, 0.0
    %v895 = vmax.f32 %v873, 0.0
    %v896 = vmax.f32 %v874, 0.0
    %v897 = vmax.f32 %v875, 0.0
    %v898 = vmax.f32 %v876, 0.0
    %v899 = vmax.f32 %v877, 0.0
    %v900 = vmax.f32 %v878, 0.0
    %v901 = vmax.f32 %v879, 0.0
    %v902 = vmax.f32 %v880, 0.0
    %v903 = vmax.f32 %v881, 0.0
    %v904 = vmax.f32 %v882, 0.0
    %v905 = vmax.f32 %v883, 0.0
    %v906 = vmax.f32 %v884, 0.0
    %v907 = vmax.f32 %v885, 0.0
    %v908 = vmax.f32 %v886, 0.0
    %v909 = vmax.f32 %v887, 0.0
    %v910 = vmax.f32 %v888, 0.0
    %v911 = vmax.f32 %v889, 0.0
    %v912 = vmax.f32 %v890, 0.0
    %913 = vst [vmem:[%s2] sm:$0xff] %v891
    %914 = vst [vmem:[%s2 + $0x8] sm:$0xff] %v892
    %915 = vst [vmem:[%s2 + $0x10] sm:$0xff] %v893
    %916 = vst [vmem:[%s2 + $0x18] sm:$0xff] %v894
    %917 = vst [vmem:[%s2 + $0x20] sm:$0xff] %v895
    %918 = vst [vmem:[%s2 + $0x28] sm:$0xff] %v896
    %919 = vst [vmem:[%s2 + $0x30] sm:$0xff] %v897
    %920 = vst [vmem:[%s2 + $0x38] sm:$0xff] %v898
    %921 = vst [vmem:[%s2 + $0x40] sm:$0xff] %v899
    %922 = vst [vmem:[%s2 + $0x48] sm:$0xff] %v900
    %923 = vst [vmem:[%s2 + $0x50] sm:$0xff] %v901
    %924 = vst [vmem:[%s2 + $0x58] sm:$0xff] %v902
    %925 = vst [vmem:[%s2 + $0x60] sm:$0xff] %v903
    %926 = vst [vmem:[%s2 + $0x68] sm:$0xff] %v904
    %927 = vst [vmem:[%s2 + $0x70] sm:$0xff] %v905
    %928 = vst [vmem:[%s2 + $0x78] sm:$0xff] %v906
    %929 = vst [vmem:[%s2 + $0x80] sm:$0xff] %v907
    %930 = vst [vmem:[%s2 + $0x88] sm:$0xff] %v908
    %931 = vst [vmem:[%s2 + $0x90] sm:$0xff] %v909
    %932 = vst [vmem:[%s2 + $0x98] sm:$0xff] %v910
    %933 = vst [vmem:[%s2 + $0xa0] sm:$0xff] %v911
    %934 = vst [vmem:[%s2 + $0xa8] sm:$0xff] %v912
  $region17: #{encoder_unet_forward.4} parent=0 // pred_fallthru
    _
  // Predicated region
  $region18: #{encoder_unet_forward.4} parent=0 // pred_check
    _
  $region19: #{encoder_unet_forward.4} parent=0 // pred_check_branch
    %936 = sbr.rel (0) target = $region21
  $region20: #{encoder_unet_forward.4} parent=0 // pred_region
    _
  $region21: #{encoder_unet_forward.4} parent=0 // pred_fallthru
    _
  // Predicated region
  $region22: #{encoder_unet_forward.4} parent=0 // pred_check
    _
  $region23: #{encoder_unet_forward.4} parent=0 // pred_check_branch
    %938 = sbr.rel (0) target = $region25
  $region24: #{encoder_unet_forward.4} parent=0 // pred_region
    _
  $region25: #{encoder_unet_forward.4} parent=0 // pred_fallthru
    _

// kernel: encoder_unet_forward.5
$region0: #{encoder_unet_forward.5}
  #allocation0 [shape = 'u32[]', space=smem, size = 0x4, offset = 0x4, fixed_abs, tag = 'smem constant byte address 0x4 - core index']
  #allocation1 [shape = 'u32[144,128]{1,0:T(1,128)}', space=vmem, size = 0x12000, scoped, tag = 'internal scratch']
  #allocation2 [shape = 'f32[32,128]{1,0:T(8,128)}', space=vmem, size = 0x4000, scoped, tag = 'scratch operand']
  %s0 = inlined_call_operand.vmem [shape: bf16[32,1024], index: 0, kind: input, shape index: {}]
  %s1 = inlined_call_operand.vmem [shape: bf16[1024,128], index: 1, kind: input, shape index: {}]
  %s2 = inlined_call_operand.hbm [shape: f32[32,128], index: 2, kind: output, shape index: {}]
  %s3 = sld [smem:[#allocation0]]
  $region26: #{encoder_unet_forward.5} parent=0
    _
  %s5 = ssub.s32 1, %s3
  %s6 = scalar_select 0, %s5, %s3
  $region1: #{encoder_unet_forward.5} parent=0
    #allocation3 [shape = 'u8[16384]{0}', space=vmem, size = 0x4000, scoped, tag = 'output window, operand 0, single buffered']
    #allocation4 [shape = 's32[1]{0}', space=sflag, size = 0x4, scoped, tag = 'scoped memory for encoder_unet_forward.5']
    %7 = vsyncpa [#allocation4], 0
    // Predicated region
    $region2: #{encoder_unet_forward.5} parent=1 // pred_check
      _
    $region3: #{encoder_unet_forward.5} parent=1 // pred_check_branch
      %9 = sbr.rel (0) target = $region5
    $region4: #{encoder_unet_forward.5} parent=1 // pred_region
      _
    $region5: #{encoder_unet_forward.5} parent=1 // pred_fallthru
      _
    // Predicated region
    $region6: #{encoder_unet_forward.5} parent=1 // pred_check
      _
    $region7: #{encoder_unet_forward.5} parent=1 // pred_check_branch
      %11 = sbr.rel (0) target = $region9
    $region8: #{encoder_unet_forward.5} parent=1 // pred_region
      _
    $region9: #{encoder_unet_forward.5} parent=1 // pred_fallthru
      _
    %p13 = scmp.eq.s32.totalorder 0, 0
    // Predicated region
    $region10: #{encoder_unet_forward.5} parent=1 // pred_check
      %p14 = pneg %p13
    $region11: #{encoder_unet_forward.5} parent=1 // pred_check_branch
      %16 = sbr.rel (%p14) target = $region13
    $region12: #{encoder_unet_forward.5} parent=1 // pred_region
      %17 = vst [vmem:[#allocation2] sm:$0xff] 0.0
      %18 = vst [vmem:[#allocation2 + $0x8] sm:$0xff] 0.0
      %19 = vst [vmem:[#allocation2 + $0x10] sm:$0xff] 0.0
      %20 = vst [vmem:[#allocation2 + $0x18] sm:$0xff] 0.0
    $region13: #{encoder_unet_forward.5} parent=1 // pred_fallthru
      _
    %v21 = vld [vmem:[#allocation2] sm:$0xff]
    %v22 = vld [vmem:[#allocation2 + $0x8] sm:$0xff]
    %v23 = vld [vmem:[#allocation2 + $0x10] sm:$0xff]
    %v24 = vld [vmem:[#allocation2 + $0x18] sm:$0xff]
    %v25 = vld [vmem:[%s0] sm:$0xff]
    %v26 = vld [vmem:[%s0 + $0x8] sm:$0xff]
    %v27 = vld [vmem:[%s0 + $0x10] sm:$0xff]
    %v28 = vld [vmem:[%s0 + $0x18] sm:$0xff]
    %v29 = vld [vmem:[%s0 + $0x20] sm:$0xff]
    %v30 = vld [vmem:[%s0 + $0x28] sm:$0xff]
    %v31 = vld [vmem:[%s0 + $0x30] sm:$0xff]
    %v32 = vld [vmem:[%s0 + $0x38] sm:$0xff]
    %v33 = vld [vmem:[%s0 + $0x40] sm:$0xff]
    %v34 = vld [vmem:[%s0 + $0x48] sm:$0xff]
    %v35 = vld [vmem:[%s0 + $0x50] sm:$0xff]
    %v36 = vld [vmem:[%s0 + $0x58] sm:$0xff]
    %v37 = vld [vmem:[%s0 + $0x60] sm:$0xff]
    %v38 = vld [vmem:[%s0 + $0x68] sm:$0xff]
    %v39 = vld [vmem:[%s0 + $0x70] sm:$0xff]
    %v40 = vld [vmem:[%s0 + $0x78] sm:$0xff]
    %v41 = vld [vmem:[%s1] sm:$0xf]
    %v42 = vld [vmem:[%s1 + $0x4] sm:$0xf]
    %v43 = vld [vmem:[%s1 + $0x8] sm:$0xf]
    %v44 = vld [vmem:[%s1 + $0xc] sm:$0xf]
    %v45 = vld [vmem:[%s1 + $0x10] sm:$0xf]
    %v46 = vld [vmem:[%s1 + $0x14] sm:$0xf]
    %v47 = vld [vmem:[%s1 + $0x18] sm:$0xf]
    %v48 = vld [vmem:[%s1 + $0x1c] sm:$0xf]
    %v49 = vld [vmem:[%s1 + $0x20] sm:$0xf]
    %v50 = vld [vmem:[%s1 + $0x24] sm:$0xf]
    %v51 = vld [vmem:[%s1 + $0x28] sm:$0xf]
    %v52 = vld [vmem:[%s1 + $0x2c] sm:$0xf]
    %v53 = vld [vmem:[%s1 + $0x30] sm:$0xf]
    %v54 = vld [vmem:[%s1 + $0x34] sm:$0xf]
    %v55 = vld [vmem:[%s1 + $0x38] sm:$0xf]
    %v56 = vld [vmem:[%s1 + $0x3c] sm:$0xf]
    %v57 = vld [vmem:[%s1 + $0x40] sm:$0xf]
    %v58 = vld [vmem:[%s1 + $0x44] sm:$0xf]
    %v59 = vld [vmem:[%s1 + $0x48] sm:$0xf]
    %v60 = vld [vmem:[%s1 + $0x4c] sm:$0xf]
    %v61 = vld [vmem:[%s1 + $0x50] sm:$0xf]
    %v62 = vld [vmem:[%s1 + $0x54] sm:$0xf]
    %v63 = vld [vmem:[%s1 + $0x58] sm:$0xf]
    %v64 = vld [vmem:[%s1 + $0x5c] sm:$0xf]
    %v65 = vld [vmem:[%s1 + $0x60] sm:$0xf]
    %v66 = vld [vmem:[%s1 + $0x64] sm:$0xf]
    %v67 = vld [vmem:[%s1 + $0x68] sm:$0xf]
    %v68 = vld [vmem:[%s1 + $0x6c] sm:$0xf]
    %v69 = vld [vmem:[%s1 + $0x70] sm:$0xf]
    %v70 = vld [vmem:[%s1 + $0x74] sm:$0xf]
    %v71 = vld [vmem:[%s1 + $0x78] sm:$0xf]
    %v72 = vld [vmem:[%s1 + $0x7c] sm:$0xf]
    %v73 = vld [vmem:[%s1 + $0x80] sm:$0xf]
    %v74 = vld [vmem:[%s1 + $0x84] sm:$0xf]
    %v75 = vld [vmem:[%s1 + $0x88] sm:$0xf]
    %v76 = vld [vmem:[%s1 + $0x8c] sm:$0xf]
    %v77 = vld [vmem:[%s1 + $0x90] sm:$0xf]
    %v78 = vld [vmem:[%s1 + $0x94] sm:$0xf]
    %v79 = vld [vmem:[%s1 + $0x98] sm:$0xf]
    %v80 = vld [vmem:[%s1 + $0x9c] sm:$0xf]
    %v81 = vld [vmem:[%s1 + $0xa0] sm:$0xf]
    %v82 = vld [vmem:[%s1 + $0xa4] sm:$0xf]
    %v83 = vld [vmem:[%s1 + $0xa8] sm:$0xf]
    %v84 = vld [vmem:[%s1 + $0xac] sm:$0xf]
    %v85 = vld [vmem:[%s1 + $0xb0] sm:$0xf]
    %v86 = vld [vmem:[%s1 + $0xb4] sm:$0xf]
    %v87 = vld [vmem:[%s1 + $0xb8] sm:$0xf]
    %v88 = vld [vmem:[%s1 + $0xbc] sm:$0xf]
    %v89 = vld [vmem:[%s1 + $0xc0] sm:$0xf]
    %v90 = vld [vmem:[%s1 + $0xc4] sm:$0xf]
    %v91 = vld [vmem:[%s1 + $0xc8] sm:$0xf]
    %v92 = vld [vmem:[%s1 + $0xcc] sm:$0xf]
    %v93 = vld [vmem:[%s1 + $0xd0] sm:$0xf]
    %v94 = vld [vmem:[%s1 + $0xd4] sm:$0xf]
    %v95 = vld [vmem:[%s1 + $0xd8] sm:$0xf]
    %v96 = vld [vmem:[%s1 + $0xdc] sm:$0xf]
    %v97 = vld [vmem:[%s1 + $0xe0] sm:$0xf]
    %v98 = vld [vmem:[%s1 + $0xe4] sm:$0xf]
    %v99 = vld [vmem:[%s1 + $0xe8] sm:$0xf]
    %v100 = vld [vmem:[%s1 + $0xec] sm:$0xf]
    %v101 = vld [vmem:[%s1 + $0xf0] sm:$0xf]
    %v102 = vld [vmem:[%s1 + $0xf4] sm:$0xf]
    %v103 = vld [vmem:[%s1 + $0xf8] sm:$0xf]
    %v104 = vld [vmem:[%s1 + $0xfc] sm:$0xf]
    %v105 = vld [vmem:[%s1 + $0x100] sm:$0xf]
    %v106 = vld [vmem:[%s1 + $0x104] sm:$0xf]
    %v107 = vld [vmem:[%s1 + $0x108] sm:$0xf]
    %v108 = vld [vmem:[%s1 + $0x10c] sm:$0xf]
    %v109 = vld [vmem:[%s1 + $0x110] sm:$0xf]
    %v110 = vld [vmem:[%s1 + $0x114] sm:$0xf]
    %v111 = vld [vmem:[%s1 + $0x118] sm:$0xf]
    %v112 = vld [vmem:[%s1 + $0x11c] sm:$0xf]
    %v113 = vld [vmem:[%s1 + $0x120] sm:$0xf]
    %v114 = vld [vmem:[%s1 + $0x124] sm:$0xf]
    %v115 = vld [vmem:[%s1 + $0x128] sm:$0xf]
    %v116 = vld [vmem:[%s1 + $0x12c] sm:$0xf]
    %v117 = vld [vmem:[%s1 + $0x130] sm:$0xf]
    %v118 = vld [vmem:[%s1 + $0x134] sm:$0xf]
    %v119 = vld [vmem:[%s1 + $0x138] sm:$0xf]
    %v120 = vld [vmem:[%s1 + $0x13c] sm:$0xf]
    %v121 = vld [vmem:[%s1 + $0x140] sm:$0xf]
    %v122 = vld [vmem:[%s1 + $0x144] sm:$0xf]
    %v123 = vld [vmem:[%s1 + $0x148] sm:$0xf]
    %v124 = vld [vmem:[%s1 + $0x14c] sm:$0xf]
    %v125 = vld [vmem:[%s1 + $0x150] sm:$0xf]
    %v126 = vld [vmem:[%s1 + $0x154] sm:$0xf]
    %v127 = vld [vmem:[%s1 + $0x158] sm:$0xf]
    %v128 = vld [vmem:[%s1 + $0x15c] sm:$0xf]
    %v129 = vld [vmem:[%s1 + $0x160] sm:$0xf]
    %v130 = vld [vmem:[%s1 + $0x164] sm:$0xf]
    %v131 = vld [vmem:[%s1 + $0x168] sm:$0xf]
    %v132 = vld [vmem:[%s1 + $0x16c] sm:$0xf]
    %v133 = vld [vmem:[%s1 + $0x170] sm:$0xf]
    %v134 = vld [vmem:[%s1 + $0x174] sm:$0xf]
    %v135 = vld [vmem:[%s1 + $0x178] sm:$0xf]
    %v136 = vld [vmem:[%s1 + $0x17c] sm:$0xf]
    %v137 = vld [vmem:[%s1 + $0x180] sm:$0xf]
    %v138 = vld [vmem:[%s1 + $0x184] sm:$0xf]
    %v139 = vld [vmem:[%s1 + $0x188] sm:$0xf]
    %v140 = vld [vmem:[%s1 + $0x18c] sm:$0xf]
    %v141 = vld [vmem:[%s1 + $0x190] sm:$0xf]
    %v142 = vld [vmem:[%s1 + $0x194] sm:$0xf]
    %v143 = vld [vmem:[%s1 + $0x198] sm:$0xf]
    %v144 = vld [vmem:[%s1 + $0x19c] sm:$0xf]
    %v145 = vld [vmem:[%s1 + $0x1a0] sm:$0xf]
    %v146 = vld [vmem:[%s1 + $0x1a4] sm:$0xf]
    %v147 = vld [vmem:[%s1 + $0x1a8] sm:$0xf]
    %v148 = vld [vmem:[%s1 + $0x1ac] sm:$0xf]
    %v149 = vld [vmem:[%s1 + $0x1b0] sm:$0xf]
    %v150 = vld [vmem:[%s1 + $0x1b4] sm:$0xf]
    %v151 = vld [vmem:[%s1 + $0x1b8] sm:$0xf]
    %v152 = vld [vmem:[%s1 + $0x1bc] sm:$0xf]
    %v153 = vld [vmem:[%s1 + $0x1c0] sm:$0xf]
    %v154 = vld [vmem:[%s1 + $0x1c4] sm:$0xf]
    %v155 = vld [vmem:[%s1 + $0x1c8] sm:$0xf]
    %v156 = vld [vmem:[%s1 + $0x1cc] sm:$0xf]
    %v157 = vld [vmem:[%s1 + $0x1d0] sm:$0xf]
    %v158 = vld [vmem:[%s1 + $0x1d4] sm:$0xf]
    %v159 = vld [vmem:[%s1 + $0x1d8] sm:$0xf]
    %v160 = vld [vmem:[%s1 + $0x1dc] sm:$0xf]
    %v161 = vld [vmem:[%s1 + $0x1e0] sm:$0xf]
    %v162 = vld [vmem:[%s1 + $0x1e4] sm:$0xf]
    %v163 = vld [vmem:[%s1 + $0x1e8] sm:$0xf]
    %v164 = vld [vmem:[%s1 + $0x1ec] sm:$0xf]
    %v165 = vld [vmem:[%s1 + $0x1f0] sm:$0xf]
    %v166 = vld [vmem:[%s1 + $0x1f4] sm:$0xf]
    %v167 = vld [vmem:[%s1 + $0x1f8] sm:$0xf]
    %v168 = vld [vmem:[%s1 + $0x1fc] sm:$0xf]
    %v185 = vunpack.c.l.b16 %v25
    %v186 = vunpack.c.h.b16 %v25
    %v187 = vunpack.c.l.b16 %v26
    %v188 = vunpack.c.h.b16 %v26
    %v189 = vunpack.c.l.b16 %v27
    %v190 = vunpack.c.h.b16 %v27
    %v191 = vunpack.c.l.b16 %v28
    %v192 = vunpack.c.h.b16 %v28
    %v193 = vunpack.c.l.b16 %v29
    %v194 = vunpack.c.h.b16 %v29
    %v195 = vunpack.c.l.b16 %v30
    %v196 = vunpack.c.h.b16 %v30
    %v197 = vunpack.c.l.b16 %v31
    %v198 = vunpack.c.h.b16 %v31
    %v199 = vunpack.c.l.b16 %v32
    %v200 = vunpack.c.h.b16 %v32
    %v201 = vunpack.c.l.b16 %v33
    %v202 = vunpack.c.h.b16 %v33
    %v203 = vunpack.c.l.b16 %v34
    %v204 = vunpack.c.h.b16 %v34
    %v205 = vunpack.c.l.b16 %v35
    %v206 = vunpack.c.h.b16 %v35
    %v207 = vunpack.c.l.b16 %v36
    %v208 = vunpack.c.h.b16 %v36
    %v209 = vunpack.c.l.b16 %v37
    %v210 = vunpack.c.h.b16 %v37
    %v211 = vunpack.c.l.b16 %v38
    %v212 = vunpack.c.h.b16 %v38
    %v213 = vunpack.c.l.b16 %v39
    %v214 = vunpack.c.h.b16 %v39
    %v215 = vunpack.c.l.b16 %v40
    %v216 = vunpack.c.h.b16 %v40
    %v217 = vpack.c.b16 %v193, %v185
    %v218 = vpack.c.b16 %v194, %v186
    %v219 = vpack.c.b16 %v195, %v187
    %v220 = vpack.c.b16 %v196, %v188
    %v221 = vpack.c.b16 %v197, %v189
    %v222 = vpack.c.b16 %v198, %v190
    %v223 = vpack.c.b16 %v199, %v191
    %v224 = vpack.c.b16 %v200, %v192
    %v225 = vpack.c.b16 %v209, %v201
    %v226 = vpack.c.b16 %v210, %v202
    %v227 = vpack.c.b16 %v211, %v203
    %v228 = vpack.c.b16 %v212, %v204
    %v229 = vpack.c.b16 %v213, %v205
    %v230 = vpack.c.b16 %v214, %v206
    %v231 = vpack.c.b16 %v215, %v207
    %v232 = vpack.c.b16 %v216, %v208
    %v377 = vunpack.c.l.b16 %v41
    %v378 = vunpack.c.l.b16 %v42
    %v379 = vunpack.c.l.b16 %v43
    %v380 = vunpack.c.l.b16 %v44
    %v381 = vunpack.c.l.b16 %v45
    %v382 = vunpack.c.l.b16 %v46
    %v383 = vunpack.c.l.b16 %v47
    %v384 = vunpack.c.l.b16 %v48
    %v385 = vunpack.c.l.b16 %v49
    %v386 = vunpack.c.l.b16 %v50
    %v387 = vunpack.c.l.b16 %v51
    %v388 = vunpack.c.l.b16 %v52
    %v389 = vunpack.c.l.b16 %v53
    %v390 = vunpack.c.l.b16 %v54
    %v391 = vunpack.c.l.b16 %v55
    %v392 = vunpack.c.l.b16 %v56
    %v393 = vunpack.c.l.b16 %v57
    %v394 = vunpack.c.l.b16 %v58
    %v395 = vunpack.c.l.b16 %v59
    %v396 = vunpack.c.l.b16 %v60
    %v397 = vunpack.c.l.b16 %v61
    %v398 = vunpack.c.l.b16 %v62
    %v399 = vunpack.c.l.b16 %v63
    %v400 = vunpack.c.l.b16 %v64
    %v401 = vunpack.c.l.b16 %v65
    %v402 = vunpack.c.l.b16 %v66
    %v403 = vunpack.c.l.b16 %v67
    %v404 = vunpack.c.l.b16 %v68
    %v405 = vunpack.c.l.b16 %v69
    %v406 = vunpack.c.l.b16 %v70
    %v407 = vunpack.c.l.b16 %v71
    %v408 = vunpack.c.l.b16 %v72
    %v409 = vunpack.c.l.b16 %v73
    %v410 = vunpack.c.l.b16 %v74
    %v411 = vunpack.c.l.b16 %v75
    %v412 = vunpack.c.l.b16 %v76
    %v413 = vunpack.c.l.b16 %v77
    %v414 = vunpack.c.l.b16 %v78
    %v415 = vunpack.c.l.b16 %v79
    %v416 = vunpack.c.l.b16 %v80
    %v417 = vunpack.c.l.b16 %v81
    %v418 = vunpack.c.l.b16 %v82
    %v419 = vunpack.c.l.b16 %v83
    %v420 = vunpack.c.l.b16 %v84
    %v421 = vunpack.c.l.b16 %v85
    %v422 = vunpack.c.l.b16 %v86
    %v423 = vunpack.c.l.b16 %v87
    %v424 = vunpack.c.l.b16 %v88
    %v425 = vunpack.c.l.b16 %v89
    %v426 = vunpack.c.l.b16 %v90
    %v427 = vunpack.c.l.b16 %v91
    %v428 = vunpack.c.l.b16 %v92
    %v429 = vunpack.c.l.b16 %v93
    %v430 = vunpack.c.l.b16 %v94
    %v431 = vunpack.c.l.b16 %v95
    %v432 = vunpack.c.l.b16 %v96
    %v433 = vunpack.c.l.b16 %v97
    %v434 = vunpack.c.l.b16 %v98
    %v435 = vunpack.c.l.b16 %v99
    %v436 = vunpack.c.l.b16 %v100
    %v437 = vunpack.c.l.b16 %v101
    %v438 = vunpack.c.l.b16 %v102
    %v439 = vunpack.c.l.b16 %v103
    %v440 = vunpack.c.l.b16 %v104
    %v441 = vunpack.c.l.b16 %v105
    %v442 = vunpack.c.l.b16 %v106
    %v443 = vunpack.c.l.b16 %v107
    %v444 = vunpack.c.l.b16 %v108
    %v445 = vunpack.c.l.b16 %v109
    %v446 = vunpack.c.l.b16 %v110
    %v447 = vunpack.c.l.b16 %v111
    %v448 = vunpack.c.l.b16 %v112
    %v449 = vunpack.c.l.b16 %v113
    %v450 = vunpack.c.l.b16 %v114
    %v451 = vunpack.c.l.b16 %v115
    %v452 = vunpack.c.l.b16 %v116
    %v453 = vunpack.c.l.b16 %v117
    %v454 = vunpack.c.l.b16 %v118
    %v455 = vunpack.c.l.b16 %v119
    %v456 = vunpack.c.l.b16 %v120
    %v457 = vunpack.c.l.b16 %v121
    %v458 = vunpack.c.l.b16 %v122
    %v459 = vunpack.c.l.b16 %v123
    %v460 = vunpack.c.l.b16 %v124
    %v461 = vunpack.c.l.b16 %v125
    %v462 = vunpack.c.l.b16 %v126
    %v463 = vunpack.c.l.b16 %v127
    %v464 = vunpack.c.l.b16 %v128
    %v465 = vunpack.c.l.b16 %v129
    %v466 = vunpack.c.l.b16 %v130
    %v467 = vunpack.c.l.b16 %v131
    %v468 = vunpack.c.l.b16 %v132
    %v469 = vunpack.c.l.b16 %v133
    %v470 = vunpack.c.l.b16 %v134
    %v471 = vunpack.c.l.b16 %v135
    %v472 = vunpack.c.l.b16 %v136
    %v473 = vunpack.c.l.b16 %v137
    %v474 = vunpack.c.l.b16 %v138
    %v475 = vunpack.c.l.b16 %v139
    %v476 = vunpack.c.l.b16 %v140
    %v477 = vunpack.c.l.b16 %v141
    %v478 = vunpack.c.l.b16 %v142
    %v479 = vunpack.c.l.b16 %v143
    %v480 = vunpack.c.l.b16 %v144
    %v481 = vunpack.c.l.b16 %v145
    %v482 = vunpack.c.l.b16 %v146
    %v483 = vunpack.c.l.b16 %v147
    %v484 = vunpack.c.l.b16 %v148
    %v485 = vunpack.c.l.b16 %v149
    %v486 = vunpack.c.l.b16 %v150
    %v487 = vunpack.c.l.b16 %v151
    %v488 = vunpack.c.l.b16 %v152
    %v489 = vunpack.c.l.b16 %v153
    %v490 = vunpack.c.l.b16 %v154
    %v491 = vunpack.c.l.b16 %v155
    %v492 = vunpack.c.l.b16 %v156
    %v493 = vunpack.c.l.b16 %v157
    %v494 = vunpack.c.l.b16 %v158
    %v495 = vunpack.c.l.b16 %v159
    %v496 = vunpack.c.l.b16 %v160
    %v497 = vunpack.c.l.b16 %v161
    %v498 = vunpack.c.l.b16 %v162
    %v499 = vunpack.c.l.b16 %v163
    %v500 = vunpack.c.l.b16 %v164
    %v501 = vunpack.c.l.b16 %v165
    %v502 = vunpack.c.l.b16 %v166
    %v503 = vunpack.c.l.b16 %v167
    %v504 = vunpack.c.l.b16 %v168
    %v505 = vpack.c.b16 %v378, %v377
    %v506 = vpack.c.b16 %v380, %v379
    %v507 = vpack.c.b16 %v382, %v381
    %v508 = vpack.c.b16 %v384, %v383
    %v509 = vpack.c.b16 %v386, %v385
    %v510 = vpack.c.b16 %v388, %v387
    %v511 = vpack.c.b16 %v390, %v389
    %v512 = vpack.c.b16 %v392, %v391
    %v513 = vpack.c.b16 %v394, %v393
    %v514 = vpack.c.b16 %v396, %v395
    %v515 = vpack.c.b16 %v398, %v397
    %v516 = vpack.c.b16 %v400, %v399
    %v517 = vpack.c.b16 %v402, %v401
    %v518 = vpack.c.b16 %v404, %v403
    %v519 = vpack.c.b16 %v406, %v405
    %v520 = vpack.c.b16 %v408, %v407
    %v521 = vpack.c.b16 %v410, %v409
    %v522 = vpack.c.b16 %v412, %v411
    %v523 = vpack.c.b16 %v414, %v413
    %v524 = vpack.c.b16 %v416, %v415
    %v525 = vpack.c.b16 %v418, %v417
    %v526 = vpack.c.b16 %v420, %v419
    %v527 = vpack.c.b16 %v422, %v421
    %v528 = vpack.c.b16 %v424, %v423
    %v529 = vpack.c.b16 %v426, %v425
    %v530 = vpack.c.b16 %v428, %v427
    %v531 = vpack.c.b16 %v430, %v429
    %v532 = vpack.c.b16 %v432, %v431
    %v533 = vpack.c.b16 %v434, %v433
    %v534 = vpack.c.b16 %v436, %v435
    %v535 = vpack.c.b16 %v438, %v437
    %v536 = vpack.c.b16 %v440, %v439
    %v537 = vpack.c.b16 %v442, %v441
    %v538 = vpack.c.b16 %v444, %v443
    %v539 = vpack.c.b16 %v446, %v445
    %v540 = vpack.c.b16 %v448, %v447
    %v541 = vpack.c.b16 %v450, %v449
    %v542 = vpack.c.b16 %v452, %v451
    %v543 = vpack.c.b16 %v454, %v453
    %v544 = vpack.c.b16 %v456, %v455
    %v545 = vpack.c.b16 %v458, %v457
    %v546 = vpack.c.b16 %v460, %v459
    %v547 = vpack.c.b16 %v462, %v461
    %v548 = vpack.c.b16 %v464, %v463
    %v549 = vpack.c.b16 %v466, %v465
    %v550 = vpack.c.b16 %v468, %v467
    %v551 = vpack.c.b16 %v470, %v469
    %v552 = vpack.c.b16 %v472, %v471
    %v553 = vpack.c.b16 %v474, %v473
    %v554 = vpack.c.b16 %v476, %v475
    %v555 = vpack.c.b16 %v478, %v477
    %v556 = vpack.c.b16 %v480, %v479
    %v557 = vpack.c.b16 %v482, %v481
    %v558 = vpack.c.b16 %v484, %v483
    %v559 = vpack.c.b16 %v486, %v485
    %v560 = vpack.c.b16 %v488, %v487
    %v561 = vpack.c.b16 %v490, %v489
    %v562 = vpack.c.b16 %v492, %v491
    %v563 = vpack.c.b16 %v494, %v493
    %v564 = vpack.c.b16 %v496, %v495
    %v565 = vpack.c.b16 %v498, %v497
    %v566 = vpack.c.b16 %v500, %v499
    %v567 = vpack.c.b16 %v502, %v501
    %v568 = vpack.c.b16 %v504, %v503
    %633 = vmatprep.subr.bf16.mxu0 0
    %634 = vmatpush1.bf16.msra.mxu0 %v512
    %635 = vmatprep.subr.bf16.mxu0 0
    %636 = vmatpush1.bf16.msra.mxu0 %v511
    %637 = vmatprep.subr.bf16.mxu0 0
    %638 = vmatpush1.bf16.msra.mxu0 %v510
    %639 = vmatprep.subr.bf16.mxu0 0
    %640 = vmatpush1.bf16.msra.mxu0 %v509
    %641 = vmatprep.subr.bf16.mxu0 0
    %642 = vmatpush1.bf16.msra.mxu0 %v508
    %643 = vmatprep.subr.bf16.mxu0 0
    %644 = vmatpush1.bf16.msra.mxu0 %v507
    %645 = vmatprep.subr.bf16.mxu0 0
    %646 = vmatpush1.bf16.msra.mxu0 %v506
    %647 = vmatprep.subr.bf16.mxu0 0
    %648 = vmatpush1.bf16.msra.mxu0 %v505
    %649 = vmatprep.subr.bf16.mxu0 0
    %650 = vmatpush2.bf16.msra.mxu0 %v520
    %651 = vmatprep.subr.bf16.mxu0 0
    %652 = vmatpush2.bf16.msra.mxu0 %v519
    %653 = vmatprep.subr.bf16.mxu0 0
    %654 = vmatpush2.bf16.msra.mxu0 %v518
    %655 = vmatprep.subr.bf16.mxu0 0
    %656 = vmatpush2.bf16.msra.mxu0 %v517
    %657 = vmatprep.subr.bf16.mxu0 0
    %658 = vmatpush2.bf16.msra.mxu0 %v516
    %659 = vmatprep.subr.bf16.mxu0 0
    %660 = vmatpush2.bf16.msra.mxu0 %v515
    %661 = vmatprep.subr.bf16.mxu0 0
    %662 = vmatpush2.bf16.msra.mxu0 %v514
    %663 = vmatprep.subr.bf16.mxu0 0
    %664 = vmatpush2.bf16.msra.mxu0 %v513
    %665 = vmatprep.mubr.bf16.mxu0 %v218
    %666 = vmatmul.mubr.bf16.gmra.mxu0 %v217
    %v667 = vpop.f32.mrf.mxu0
    %v668 = vadd.f32 0.0, %v667
    %v669 = vpop.f32.mrf.mxu0
    %v670 = vpop.f32.mrf.mxu0
    %v671 = vadd.f32 0.0, %v670
    %v672 = vpop.f32.mrf.mxu0
    %673 = vmatprep.mubr.bf16.mxu0 %v226
    %674 = vmatmul.mubr.bf16.gmra.mxu0 %v225
    %v675 = vpop.f32.mrf.mxu0
    %v676 = vadd.f32 0.0, %v675
    %v677 = vpop.f32.mrf.mxu0
    %v678 = vpop.f32.mrf.mxu0
    %v679 = vadd.f32 0.0, %v678
    %v680 = vpop.f32.mrf.mxu0
    %681 = vdwg.mxu0
    %682 = vmatprep.subr.bf16.mxu0 0
    %683 = vmatpush1.bf16.msra.mxu0 %v528
    %684 = vmatprep.subr.bf16.mxu0 0
    %685 = vmatpush1.bf16.msra.mxu0 %v527
    %686 = vmatprep.subr.bf16.mxu0 0
    %687 = vmatpush1.bf16.msra.mxu0 %v526
    %688 = vmatprep.subr.bf16.mxu0 0
    %689 = vmatpush1.bf16.msra.mxu0 %v525
    %690 = vmatprep.subr.bf16.mxu0 0
    %691 = vmatpush1.bf16.msra.mxu0 %v524
    %692 = vmatprep.subr.bf16.mxu0 0
    %693 = vmatpush1.bf16.msra.mxu0 %v523
    %694 = vmatprep.subr.bf16.mxu0 0
    %695 = vmatpush1.bf16.msra.mxu0 %v522
    %696 = vmatprep.subr.bf16.mxu0 0
    %697 = vmatpush1.bf16.msra.mxu0 %v521
    %698 = vmatprep.subr.bf16.mxu0 0
    %699 = vmatpush2.bf16.msra.mxu0 %v536
    %700 = vmatprep.subr.bf16.mxu0 0
    %701 = vmatpush2.bf16.msra.mxu0 %v535
    %702 = vmatprep.subr.bf16.mxu0 0
    %703 = vmatpush2.bf16.msra.mxu0 %v534
    %704 = vmatprep.subr.bf16.mxu0 0
    %705 = vmatpush2.bf16.msra.mxu0 %v533
    %706 = vmatprep.subr.bf16.mxu0 0
    %707 = vmatpush2.bf16.msra.mxu0 %v532
    %708 = vmatprep.subr.bf16.mxu0 0
    %709 = vmatpush2.bf16.msra.mxu0 %v531
    %710 = vmatprep.subr.bf16.mxu0 0
    %711 = vmatpush2.bf16.msra.mxu0 %v530
    %712 = vmatprep.subr.bf16.mxu0 0
    %713 = vmatpush2.bf16.msra.mxu0 %v529
    %714 = vmatprep.mubr.bf16.mxu0 %v220
    %715 = vmatmul.mubr.bf16.gmra.mxu0 %v219
    %v716 = vpop.f32.mrf.mxu0
    %v717 = vadd.f32 %v668, %v716
    %v718 = vpop.f32.mrf.mxu0
    %v719 = vpop.f32.mrf.mxu0
    %v720 = vadd.f32 %v671, %v719
    %v721 = vpop.f32.mrf.mxu0
    %722 = vmatprep.mubr.bf16.mxu0 %v228
    %723 = vmatmul.mubr.bf16.gmra.mxu0 %v227
    %v724 = vpop.f32.mrf.mxu0
    %v725 = vadd.f32 %v676, %v724
    %v726 = vpop.f32.mrf.mxu0
    %v727 = vpop.f32.mrf.mxu0
    %v728 = vadd.f32 %v679, %v727
    %v729 = vpop.f32.mrf.mxu0
    %730 = vdwg.mxu0
    %731 = vmatprep.subr.bf16.mxu0 0
    %732 = vmatpush1.bf16.msra.mxu0 %v544
    %733 = vmatprep.subr.bf16.mxu0 0
    %734 = vmatpush1.bf16.msra.mxu0 %v543
    %735 = vmatprep.subr.bf16.mxu0 0
    %736 = vmatpush1.bf16.msra.mxu0 %v542
    %737 = vmatprep.subr.bf16.mxu0 0
    %738 = vmatpush1.bf16.msra.mxu0 %v541
    %739 = vmatprep.subr.bf16.mxu0 0
    %740 = vmatpush1.bf16.msra.mxu0 %v540
    %741 = vmatprep.subr.bf16.mxu0 0
    %742 = vmatpush1.bf16.msra.mxu0 %v539
    %743 = vmatprep.subr.bf16.mxu0 0
    %744 = vmatpush1.bf16.msra.mxu0 %v538
    %745 = vmatprep.subr.bf16.mxu0 0
    %746 = vmatpush1.bf16.msra.mxu0 %v537
    %747 = vmatprep.subr.bf16.mxu0 0
    %748 = vmatpush2.bf16.msra.mxu0 %v552
    %749 = vmatprep.subr.bf16.mxu0 0
    %750 = vmatpush2.bf16.msra.mxu0 %v551
    %751 = vmatprep.subr.bf16.mxu0 0
    %752 = vmatpush2.bf16.msra.mxu0 %v550
    %753 = vmatprep.subr.bf16.mxu0 0
    %754 = vmatpush2.bf16.msra.mxu0 %v549
    %755 = vmatprep.subr.bf16.mxu0 0
    %756 = vmatpush2.bf16.msra.mxu0 %v548
    %757 = vmatprep.subr.bf16.mxu0 0
    %758 = vmatpush2.bf16.msra.mxu0 %v547
    %759 = vmatprep.subr.bf16.mxu0 0
    %760 = vmatpush2.bf16.msra.mxu0 %v546
    %761 = vmatprep.subr.bf16.mxu0 0
    %762 = vmatpush2.bf16.msra.mxu0 %v545
    %763 = vmatprep.mubr.bf16.mxu0 %v222
    %764 = vmatmul.mubr.bf16.gmra.mxu0 %v221
    %v765 = vpop.f32.mrf.mxu0
    %v766 = vadd.f32 %v717, %v765
    %v767 = vpop.f32.mrf.mxu0
    %v768 = vpop.f32.mrf.mxu0
    %v769 = vadd.f32 %v720, %v768
    %v770 = vpop.f32.mrf.mxu0
    %771 = vmatprep.mubr.bf16.mxu0 %v230
    %772 = vmatmul.mubr.bf16.gmra.mxu0 %v229
    %v773 = vpop.f32.mrf.mxu0
    %v774 = vadd.f32 %v725, %v773
    %v775 = vpop.f32.mrf.mxu0
    %v776 = vpop.f32.mrf.mxu0
    %v777 = vadd.f32 %v728, %v776
    %v778 = vpop.f32.mrf.mxu0
    %779 = vdwg.mxu0
    %780 = vmatprep.subr.bf16.mxu0 0
    %781 = vmatpush1.bf16.msra.mxu0 %v560
    %782 = vmatprep.subr.bf16.mxu0 0
    %783 = vmatpush1.bf16.msra.mxu0 %v559
    %784 = vmatprep.subr.bf16.mxu0 0
    %785 = vmatpush1.bf16.msra.mxu0 %v558
    %786 = vmatprep.subr.bf16.mxu0 0
    %787 = vmatpush1.bf16.msra.mxu0 %v557
    %788 = vmatprep.subr.bf16.mxu0 0
    %789 = vmatpush1.bf16.msra.mxu0 %v556
    %790 = vmatprep.subr.bf16.mxu0 0
    %791 = vmatpush1.bf16.msra.mxu0 %v555
    %792 = vmatprep.subr.bf16.mxu0 0
    %793 = vmatpush1.bf16.msra.mxu0 %v554
    %794 = vmatprep.subr.bf16.mxu0 0
    %795 = vmatpush1.bf16.msra.mxu0 %v553
    %796 = vmatprep.subr.bf16.mxu0 0
    %797 = vmatpush2.bf16.msra.mxu0 %v568
    %798 = vmatprep.subr.bf16.mxu0 0
    %799 = vmatpush2.bf16.msra.mxu0 %v567
    %800 = vmatprep.subr.bf16.mxu0 0
    %801 = vmatpush2.bf16.msra.mxu0 %v566
    %802 = vmatprep.subr.bf16.mxu0 0
    %803 = vmatpush2.bf16.msra.mxu0 %v565
    %804 = vmatprep.subr.bf16.mxu0 0
    %805 = vmatpush2.bf16.msra.mxu0 %v564
    %806 = vmatprep.subr.bf16.mxu0 0
    %807 = vmatpush2.bf16.msra.mxu0 %v563
    %808 = vmatprep.subr.bf16.mxu0 0
    %809 = vmatpush2.bf16.msra.mxu0 %v562
    %810 = vmatprep.subr.bf16.mxu0 0
    %811 = vmatpush2.bf16.msra.mxu0 %v561
    %812 = vmatprep.mubr.bf16.mxu0 %v224
    %813 = vmatmul.mubr.bf16.gmra.mxu0 %v223
    %v814 = vpop.f32.mrf.mxu0
    %v815 = vadd.f32 %v766, %v814
    %v816 = vpop.f32.mrf.mxu0
    %v817 = vpop.f32.mrf.mxu0
    %v818 = vadd.f32 %v769, %v817
    %v819 = vpop.f32.mrf.mxu0
    %820 = vmatprep.mubr.bf16.mxu0 %v232
    %821 = vmatmul.mubr.bf16.gmra.mxu0 %v231
    %v822 = vpop.f32.mrf.mxu0
    %v823 = vadd.f32 %v774, %v822
    %v824 = vpop.f32.mrf.mxu0
    %v825 = vpop.f32.mrf.mxu0
    %v826 = vadd.f32 %v777, %v825
    %v827 = vpop.f32.mrf.mxu0
    %828 = vdwg.mxu0
    %v829 = vadd.f32 %v21, %v815
    %v830 = vadd.f32 %v22, %v818
    %v831 = vadd.f32 %v23, %v823
    %v832 = vadd.f32 %v24, %v826
    %833 = vst [vmem:[#allocation2] sm:$0xff] %v829
    %834 = vst [vmem:[#allocation2 + $0x8] sm:$0xff] %v830
    %835 = vst [vmem:[#allocation2 + $0x10] sm:$0xff] %v831
    %836 = vst [vmem:[#allocation2 + $0x18] sm:$0xff] %v832
    // Predicated region
    $region14: #{encoder_unet_forward.5} parent=1 // pred_check
      %p837 = pneg %p13
    $region15: #{encoder_unet_forward.5} parent=1 // pred_check_branch
      %839 = sbr.rel (%p837) target = $region17
    $region16: #{encoder_unet_forward.5} parent=1 // pred_region
      %v840 = vld [vmem:[#allocation2] sm:$0xff]
      %v841 = vld [vmem:[#allocation2 + $0x8] sm:$0xff]
      %v842 = vld [vmem:[#allocation2 + $0x10] sm:$0xff]
      %v843 = vld [vmem:[#allocation2 + $0x18] sm:$0xff]
      %v844 = vmax.f32 %v840, 0.0
      %v845 = vmax.f32 %v841, 0.0
      %v846 = vmax.f32 %v842, 0.0
      %v847 = vmax.f32 %v843, 0.0
      %848 = vst [vmem:[#allocation3] sm:$0xff] %v844
      %849 = vst [vmem:[#allocation3 + $0x8] sm:$0xff] %v845
      %850 = vst [vmem:[#allocation3 + $0x10] sm:$0xff] %v846
      %851 = vst [vmem:[#allocation3 + $0x18] sm:$0xff] %v847
    $region17: #{encoder_unet_forward.5} parent=1 // pred_fallthru
      _
    // Predicated region
    $region18: #{encoder_unet_forward.5} parent=1 // pred_check
      _
    $region19: #{encoder_unet_forward.5} parent=1 // pred_check_branch
      %853 = sbr.rel (0) target = $region21
    $region20: #{encoder_unet_forward.5} parent=1 // pred_region
      %s855 = ssub.s32 512, 512
      %856 = vsyncadd [#allocation4], %s855
      %s857 = sshll.u32 [#allocation3], 4
      %s858 = int_to_ptr.vmem [resolvable:$true] %s857
      %863 = dma.vmem_to_hbm [thread:$0]  %s858, 512, %s2, [#allocation4], 128, 128, 8
    $region21: #{encoder_unet_forward.5} parent=1 // pred_fallthru
      _
    // Predicated region
    $region22: #{encoder_unet_forward.5} parent=1 // pred_check
      _
    $region23: #{encoder_unet_forward.5} parent=1 // pred_check_branch
      %865 = sbr.rel (0) target = $region25
    $region24: #{encoder_unet_forward.5} parent=1 // pred_region
      %866 = dma.done [#allocation4], 512
    $region25: #{encoder_unet_forward.5} parent=1 // pred_fallthru
      _
    %867 = vsyncpa [#allocation4], 1

</llo_original>
